<compile_context>
chip_gen: v7x
topology: tpu7x:2x2x1
jax: 0.10.0
libtpu: 0.0.40
codegen_flags: <defaults>
</compile_context>

<pallas_src>
import jax
import jax.numpy as jnp
from jax.experimental import pallas as pl
from jax.experimental.pallas import tpu as pltpu


def _conv_bn_relu_kernel(x_ref, w_ref, bias_ref, o_ref):
    # x_ref:    (1, H+2, W+2, Cin)  bf16, zero-padded halo, one image (resident across row tiles)
    # w_ref:    (9*Cin, Coutp)      bf16, BN scale folded in, K ordered as (kh*3+kw)*Cin + ci
    # bias_ref: (1, Coutp)          f32 folded BN bias = beta - mean * gamma / sqrt(var + eps)
    # o_ref:    (1, TH, W, Coutp)   bf16 output row tile
    TH = o_ref.shape[1]
    W = o_ref.shape[2]
    Cin = x_ref.shape[3]
    Coutp = o_ref.shape[3]

    row0 = pl.multiple_of(pl.program_id(1) * TH, TH)
    # One bf16 load of the (TH+2)-row halo window; no f32 round trip, no lane-axis concat.
    xt = x_ref[:, pl.ds(row0, TH + 2), :, :]                     # (1, TH+2, W+2, Cin) bf16

    # 3x3 conv as nine shifted bf16 MXU matmuls sharing an f32 accumulator.
    acc = jnp.zeros((TH * W, Coutp), jnp.float32)
    for dy in range(3):
        for dx in range(3):
            k = dy * 3 + dx
            tap = xt[0, dy:dy + TH, dx:dx + W, :].reshape(TH * W, Cin)  # minor dim unchanged
            wk = w_ref[k * Cin:(k + 1) * Cin, :]                        # static ref slice (free view)
            acc = acc + jnp.dot(tap, wk, preferred_element_type=jnp.float32)

    # Folded-BN bias + ReLU in f32; lane-dense bf16 store.
    y = jnp.maximum(acc + bias_ref[...], 0.0)
    # TODO(synk): training-mode Dropout(0.2) omitted; eval mode is identity.
    o_ref[...] = y.reshape(1, TH, W, Coutp).astype(o_ref.dtype)


def _pick_row_tile(H, W, Coutp):
    """Largest row tile dividing H whose per-step working set fits a conservative VMEM budget."""
    budget = 4 << 20                              # per-block target; leaves headroom in 32 MiB scoped VMEM
    per_row = W * Coutp * (4 + 2 * 2)             # f32 accumulator + double-buffered bf16 output block
    th = max(1, min(H, budget // max(per_row, 1)))
    while H % th:
        th -= 1
    if th == H and H % 2 == 0:
        th = H // 2                               # ensure a >=2-extent second parallel axis (v7x, N==1)
    return th


def conv_block_forward(x_nchw, weight_oihw, gamma, beta,
                       running_mean, running_var, eps=1e-5):
    """Forward of ConvBlock (eval mode). x_nchw: (N, Cin, H, W) -> (N, Cout, H, W) bf16."""
    N, Cin, H, W = x_nchw.shape
    Cout = weight_oihw.shape[0]
    Coutp = ((Cout + 127) // 128) * 128           # lane-dense output channel count

    # Fold BatchNorm running stats into the conv: scale into weight columns, bias kept separate.
    scale = gamma / jnp.sqrt(running_var + eps)
    bias = beta - running_mean * scale
    w_folded = weight_oihw.astype(jnp.float32) * scale[:, None, None, None]

    # NCHW -> NHWC + halo pad + bf16 cast (one fused XLA pass).
    # TODO(synk): keep the model NHWC end-to-end and build the halo in-kernel to drop these passes.
    x_nhwc = jnp.transpose(x_nchw, (0, 2, 3, 1)).astype(jnp.bfloat16)
    x_pad = jnp.pad(x_nhwc, ((0, 0), (1, 1), (1, 1), (0, 0)))

    # OIHW -> (kh, kw, Cin, Cout) -> (9*Cin, Cout), pad Cout -> Coutp (lane-dense), bf16.
    w = jnp.transpose(w_folded, (2, 3, 1, 0)).reshape(9 * Cin, Cout)
    w = jnp.pad(w, ((0, 0), (0, Coutp - Cout))).astype(jnp.bfloat16)
    bias_p = jnp.pad(bias.astype(jnp.float32), (0, Coutp - Cout))[None, :]

    TH = _pick_row_tile(H, W, Coutp)

    out_nhwc = pl.pallas_call(
        _conv_bn_relu_kernel,
        out_shape=jax.ShapeDtypeStruct((N, H, W, Coutp), jnp.bfloat16),
        grid_spec=pltpu.PrefetchScalarGridSpec(
            num_scalar_prefetch=0,
            grid=(N, H // TH),
            in_specs=[
                # Full padded image; constant index along the row axis -> DMA'd once per image.
                pl.BlockSpec((1, H + 2, W + 2, Cin), lambda n, r: (n, 0, 0, 0)),
                # Grid-invariant operands (TODO(synk): pl.Buffered(1) to drop their 2nd buffer).
                pl.BlockSpec((9 * Cin, Coutp), lambda n, r: (0, 0)),
                pl.BlockSpec((1, Coutp), lambda n, r: (0, 0)),
            ],
            out_specs=pl.BlockSpec((1, TH, W, Coutp), lambda n, r: (n, r, 0, 0)),
        ),
        compiler_params=pltpu.CompilerParams(
            dimension_semantics=("parallel", "parallel"),
            vmem_limit_bytes=32 * 1024 * 1024),
    )(x_pad, w, bias_p)

    # Drop Cout padding, back to NCHW (kept bf16; epilogue math was f32).
    return jnp.transpose(out_nhwc[..., :Cout], (0, 3, 1, 2))


def _reference_folded(x_nchw, w_oihw, bias):
    """f32 conv (3x3, pad 1) with BN already folded into w/bias, then ReLU."""
    y = jax.lax.conv_general_dilated(
        x_nchw.astype(jnp.float32), w_oihw.astype(jnp.float32),
        window_strides=(1, 1), padding=((1, 1), (1, 1)),
        dimension_numbers=("NCHW", "OIHW", "NCHW"))
    return jnp.maximum(y + bias[None, :, None, None], 0.0)


if __name__ == "__main__":
    key = jax.random.PRNGKey(0)
    k_x, k_w, k_g, k_b, k_m, k_v = jax.random.split(key, 6)

    N, Cin, H, W = 2, 4, 16, 16
    Cout = 8
    eps = 1e-5

    x = jax.random.normal(k_x, (N, Cin, H, W), dtype=jnp.float32)
    weight = jax.random.normal(k_w, (Cout, Cin, 3, 3), dtype=jnp.float32) * 0.1
    gamma = 1.0 + 0.1 * jax.random.normal(k_g, (Cout,), dtype=jnp.float32)
    beta = 0.1 * jax.random.normal(k_b, (Cout,), dtype=jnp.float32)
    running_mean = 0.05 * jax.random.normal(k_m, (Cout,), dtype=jnp.float32)
    running_var = jnp.abs(jax.random.normal(k_v, (Cout,), dtype=jnp.float32)) + 0.5

    out = conv_block_forward(x, weight, gamma, beta, running_mean, running_var, eps)
    out = jax.block_until_ready(out)
    assert out.shape == (N, Cout, H, W)
    out_f32 = out.astype(jnp.float32)

    # Fold BN the same way for the references.
    scale = gamma / jnp.sqrt(running_var + eps)
    bias = beta - running_mean * scale
    w_folded = weight * scale[:, None, None, None]

    # Matched to kernel numerics: bf16-rounded input and folded weight, f32 accumulate;
    # tolerance covers the bf16 output rounding and accumulation-order differences.
    ref_matched = _reference_folded(
        x.astype(jnp.bfloat16).astype(jnp.float32),
        w_folded.astype(jnp.bfloat16).astype(jnp.float32), bias)
    assert jnp.allclose(out_f32, ref_matched, atol=2e-2, rtol=2e-2)

    # Loose sanity check against the full-f32 ConvBlock semantics (conv -> BN -> ReLU).
    ref_f32 = _reference_folded(x, w_folded, bias)
    assert jnp.allclose(out_f32, ref_f32, atol=6e-2, rtol=6e-2)

    print("KERNEL_OK")
</pallas_src>

<mosaic_0001>
module attributes {stable_mosaic.version = 11 : i64} {
  func.func @_conv_bn_relu_kernel(%arg0: i32, %arg1: i32, %arg2: memref<1x18x18x4xbf16, #tpu.memory_space<vmem>>, %arg3: memref<36x128xbf16, #tpu.memory_space<vmem>>, %arg4: memref<1x128xf32, #tpu.memory_space<vmem>>, %arg5: memref<1x8x16x128xbf16, #tpu.memory_space<vmem>>) attributes {dimension_semantics = [#tpu.dimension_semantics<parallel>, #tpu.dimension_semantics<parallel>], iteration_bounds = array<i64: 2, 2>, scalar_prefetch = 0 : i64, scratch_operands = 0 : i64, tpu.core_type = #tpu.core_type<tc>, window_params = [{transform_indices = @transform_0, window_bounds = array<i64: 1, 18, 18, 4>}, {pipeline_mode = #tpu.pipeline_mode<synchronous>, transform_indices = @transform_1, window_bounds = array<i64: 36, 128>}, {pipeline_mode = #tpu.pipeline_mode<synchronous>, transform_indices = @transform_2, window_bounds = array<i64: 1, 128>}, {transform_indices = @transform_3, window_bounds = array<i64: 1, 8, 16, 128>}]} {
    %c8_i32 = arith.constant 8 : i32
    %0 = arith.muli %arg1, %c8_i32 : i32
    %1 = tpu.assume_multiple %0, 8 : i32
    %c0 = arith.constant 0 : index
    %2 = arith.index_cast %1 : i32 to index
    %c0_0 = arith.constant 0 : index
    %c0_1 = arith.constant 0 : index
    %3 = vector.load %arg2[%c0, %2, %c0_0, %c0_1] : memref<1x18x18x4xbf16, #tpu.memory_space<vmem>>, vector<1x10x18x4xbf16>
    %cst = arith.constant 0.000000e+00 : f32
    %4 = vector.broadcast %cst : f32 to vector<128x128xf32>
    %5 = vector.extract_strided_slice %3 {offsets = [0, 0, 0, 0], sizes = [1, 8, 16, 4], strides = [1, 1, 1, 1]} : vector<1x10x18x4xbf16> to vector<1x8x16x4xbf16>
    %6 = vector.shape_cast %5 : vector<1x8x16x4xbf16> to vector<8x16x4xbf16>
    %7 = vector.shape_cast %6 : vector<8x16x4xbf16> to vector<128x4xbf16>
    %c0_2 = arith.constant 0 : index
    %c0_3 = arith.constant 0 : index
    %8 = vector.load %arg3[%c0_2, %c0_3] : memref<36x128xbf16, #tpu.memory_space<vmem>>, vector<4x128xbf16>
    %cst_4 = arith.constant dense<0.000000e+00> : vector<128x128xf32>
    %9 = tpu.matmul %7, %8, %cst_4 {dimension_numbers = #tpu.dot_dimension_numbers<[1], [0], [0], [1], [0, 0, 1, 1], [], []>} : vector<128x4xbf16>, vector<4x128xbf16>, vector<128x128xf32> -> vector<128x128xf32>
    %10 = arith.addf %4, %9 : vector<128x128xf32>
    %11 = vector.extract_strided_slice %3 {offsets = [0, 0, 1, 0], sizes = [1, 8, 16, 4], strides = [1, 1, 1, 1]} : vector<1x10x18x4xbf16> to vector<1x8x16x4xbf16>
    %12 = vector.shape_cast %11 : vector<1x8x16x4xbf16> to vector<8x16x4xbf16>
    %13 = vector.shape_cast %12 : vector<8x16x4xbf16> to vector<128x4xbf16>
    %c4 = arith.constant 4 : index
    %c0_5 = arith.constant 0 : index
    %14 = vector.load %arg3[%c4, %c0_5] : memref<36x128xbf16, #tpu.memory_space<vmem>>, vector<4x128xbf16>
    %cst_6 = arith.constant dense<0.000000e+00> : vector<128x128xf32>
    %15 = tpu.matmul %13, %14, %cst_6 {dimension_numbers = #tpu.dot_dimension_numbers<[1], [0], [0], [1], [0, 0, 1, 1], [], []>} : vector<128x4xbf16>, vector<4x128xbf16>, vector<128x128xf32> -> vector<128x128xf32>
    %16 = arith.addf %10, %15 : vector<128x128xf32>
    %17 = vector.extract_strided_slice %3 {offsets = [0, 0, 2, 0], sizes = [1, 8, 16, 4], strides = [1, 1, 1, 1]} : vector<1x10x18x4xbf16> to vector<1x8x16x4xbf16>
    %18 = vector.shape_cast %17 : vector<1x8x16x4xbf16> to vector<8x16x4xbf16>
    %19 = vector.shape_cast %18 : vector<8x16x4xbf16> to vector<128x4xbf16>
    %c8 = arith.constant 8 : index
    %c0_7 = arith.constant 0 : index
    %20 = vector.load %arg3[%c8, %c0_7] : memref<36x128xbf16, #tpu.memory_space<vmem>>, vector<4x128xbf16>
    %cst_8 = arith.constant dense<0.000000e+00> : vector<128x128xf32>
    %21 = tpu.matmul %19, %20, %cst_8 {dimension_numbers = #tpu.dot_dimension_numbers<[1], [0], [0], [1], [0, 0, 1, 1], [], []>} : vector<128x4xbf16>, vector<4x128xbf16>, vector<128x128xf32> -> vector<128x128xf32>
    %22 = arith.addf %16, %21 : vector<128x128xf32>
    %23 = vector.extract_strided_slice %3 {offsets = [0, 1, 0, 0], sizes = [1, 8, 16, 4], strides = [1, 1, 1, 1]} : vector<1x10x18x4xbf16> to vector<1x8x16x4xbf16>
    %24 = vector.shape_cast %23 : vector<1x8x16x4xbf16> to vector<8x16x4xbf16>
    %25 = vector.shape_cast %24 : vector<8x16x4xbf16> to vector<128x4xbf16>
    %c12 = arith.constant 12 : index
    %c0_9 = arith.constant 0 : index
    %26 = vector.load %arg3[%c12, %c0_9] : memref<36x128xbf16, #tpu.memory_space<vmem>>, vector<4x128xbf16>
    %cst_10 = arith.constant dense<0.000000e+00> : vector<128x128xf32>
    %27 = tpu.matmul %25, %26, %cst_10 {dimension_numbers = #tpu.dot_dimension_numbers<[1], [0], [0], [1], [0, 0, 1, 1], [], []>} : vector<128x4xbf16>, vector<4x128xbf16>, vector<128x128xf32> -> vector<128x128xf32>
    %28 = arith.addf %22, %27 : vector<128x128xf32>
    %29 = vector.extract_strided_slice %3 {offsets = [0, 1, 1, 0], sizes = [1, 8, 16, 4], strides = [1, 1, 1, 1]} : vector<1x10x18x4xbf16> to vector<1x8x16x4xbf16>
    %30 = vector.shape_cast %29 : vector<1x8x16x4xbf16> to vector<8x16x4xbf16>
    %31 = vector.shape_cast %30 : vector<8x16x4xbf16> to vector<128x4xbf16>
    %c16 = arith.constant 16 : index
    %c0_11 = arith.constant 0 : index
    %32 = vector.load %arg3[%c16, %c0_11] : memref<36x128xbf16, #tpu.memory_space<vmem>>, vector<4x128xbf16>
    %cst_12 = arith.constant dense<0.000000e+00> : vector<128x128xf32>
    %33 = tpu.matmul %31, %32, %cst_12 {dimension_numbers = #tpu.dot_dimension_numbers<[1], [0], [0], [1], [0, 0, 1, 1], [], []>} : vector<128x4xbf16>, vector<4x128xbf16>, vector<128x128xf32> -> vector<128x128xf32>
    %34 = arith.addf %28, %33 : vector<128x128xf32>
    %35 = vector.extract_strided_slice %3 {offsets = [0, 1, 2, 0], sizes = [1, 8, 16, 4], strides = [1, 1, 1, 1]} : vector<1x10x18x4xbf16> to vector<1x8x16x4xbf16>
    %36 = vector.shape_cast %35 : vector<1x8x16x4xbf16> to vector<8x16x4xbf16>
    %37 = vector.shape_cast %36 : vector<8x16x4xbf16> to vector<128x4xbf16>
    %c20 = arith.constant 20 : index
    %c0_13 = arith.constant 0 : index
    %38 = vector.load %arg3[%c20, %c0_13] : memref<36x128xbf16, #tpu.memory_space<vmem>>, vector<4x128xbf16>
    %cst_14 = arith.constant dense<0.000000e+00> : vector<128x128xf32>
    %39 = tpu.matmul %37, %38, %cst_14 {dimension_numbers = #tpu.dot_dimension_numbers<[1], [0], [0], [1], [0, 0, 1, 1], [], []>} : vector<128x4xbf16>, vector<4x128xbf16>, vector<128x128xf32> -> vector<128x128xf32>
    %40 = arith.addf %34, %39 : vector<128x128xf32>
    %41 = vector.extract_strided_slice %3 {offsets = [0, 2, 0, 0], sizes = [1, 8, 16, 4], strides = [1, 1, 1, 1]} : vector<1x10x18x4xbf16> to vector<1x8x16x4xbf16>
    %42 = vector.shape_cast %41 : vector<1x8x16x4xbf16> to vector<8x16x4xbf16>
    %43 = vector.shape_cast %42 : vector<8x16x4xbf16> to vector<128x4xbf16>
    %c24 = arith.constant 24 : index
    %c0_15 = arith.constant 0 : index
    %44 = vector.load %arg3[%c24, %c0_15] : memref<36x128xbf16, #tpu.memory_space<vmem>>, vector<4x128xbf16>
    %cst_16 = arith.constant dense<0.000000e+00> : vector<128x128xf32>
    %45 = tpu.matmul %43, %44, %cst_16 {dimension_numbers = #tpu.dot_dimension_numbers<[1], [0], [0], [1], [0, 0, 1, 1], [], []>} : vector<128x4xbf16>, vector<4x128xbf16>, vector<128x128xf32> -> vector<128x128xf32>
    %46 = arith.addf %40, %45 : vector<128x128xf32>
    %47 = vector.extract_strided_slice %3 {offsets = [0, 2, 1, 0], sizes = [1, 8, 16, 4], strides = [1, 1, 1, 1]} : vector<1x10x18x4xbf16> to vector<1x8x16x4xbf16>
    %48 = vector.shape_cast %47 : vector<1x8x16x4xbf16> to vector<8x16x4xbf16>
    %49 = vector.shape_cast %48 : vector<8x16x4xbf16> to vector<128x4xbf16>
    %c28 = arith.constant 28 : index
    %c0_17 = arith.constant 0 : index
    %50 = vector.load %arg3[%c28, %c0_17] : memref<36x128xbf16, #tpu.memory_space<vmem>>, vector<4x128xbf16>
    %cst_18 = arith.constant dense<0.000000e+00> : vector<128x128xf32>
    %51 = tpu.matmul %49, %50, %cst_18 {dimension_numbers = #tpu.dot_dimension_numbers<[1], [0], [0], [1], [0, 0, 1, 1], [], []>} : vector<128x4xbf16>, vector<4x128xbf16>, vector<128x128xf32> -> vector<128x128xf32>
    %52 = arith.addf %46, %51 : vector<128x128xf32>
    %53 = vector.extract_strided_slice %3 {offsets = [0, 2, 2, 0], sizes = [1, 8, 16, 4], strides = [1, 1, 1, 1]} : vector<1x10x18x4xbf16> to vector<1x8x16x4xbf16>
    %54 = vector.shape_cast %53 : vector<1x8x16x4xbf16> to vector<8x16x4xbf16>
    %55 = vector.shape_cast %54 : vector<8x16x4xbf16> to vector<128x4xbf16>
    %c32 = arith.constant 32 : index
    %c0_19 = arith.constant 0 : index
    %56 = vector.load %arg3[%c32, %c0_19] : memref<36x128xbf16, #tpu.memory_space<vmem>>, vector<4x128xbf16>
    %cst_20 = arith.constant dense<0.000000e+00> : vector<128x128xf32>
    %57 = tpu.matmul %55, %56, %cst_20 {dimension_numbers = #tpu.dot_dimension_numbers<[1], [0], [0], [1], [0, 0, 1, 1], [], []>} : vector<128x4xbf16>, vector<4x128xbf16>, vector<128x128xf32> -> vector<128x128xf32>
    %58 = arith.addf %52, %57 : vector<128x128xf32>
    %c0_21 = arith.constant 0 : index
    %c0_22 = arith.constant 0 : index
    %59 = vector.load %arg4[%c0_21, %c0_22] : memref<1x128xf32, #tpu.memory_space<vmem>>, vector<1x128xf32>
    %60 = vector.broadcast %59 : vector<1x128xf32> to vector<128x128xf32>
    %61 = arith.addf %58, %60 : vector<128x128xf32>
    %cst_23 = arith.constant 0.000000e+00 : f32
    %62 = vector.broadcast %cst_23 : f32 to vector<128x128xf32>
    %63 = arith.maximumf %61, %62 : vector<128x128xf32>
    %64 = vector.shape_cast %63 : vector<128x128xf32> to vector<1x8x16x128xf32>
    %65 = arith.truncf %64 : vector<1x8x16x128xf32> to vector<1x8x16x128xbf16>
    %c0_24 = arith.constant 0 : index
    %c0_25 = arith.constant 0 : index
    %c0_26 = arith.constant 0 : index
    %c0_27 = arith.constant 0 : index
    %66 = vector.load %arg5[%c0_24, %c0_25, %c0_26, %c0_27] : memref<1x8x16x128xbf16, #tpu.memory_space<vmem>>, vector<1x8x16x128xbf16>
    tpu.vector_store %arg5[%c0_24, %c0_25, %c0_26, %c0_27], %65 {strides = array<i32>} : memref<1x8x16x128xbf16, #tpu.memory_space<vmem>>, vector<1x8x16x128xbf16>,
    return
  }
  func.func @transform_0(%arg0: i32, %arg1: i32) -> (i32, i32, i32, i32) {
    %c0_i32 = arith.constant 0 : i32
    %c0_i32_0 = arith.constant 0 : i32
    %c0_i32_1 = arith.constant 0 : i32
    %c0_i32_2 = arith.constant 0 : i32
    return %arg0, %c0_i32, %c0_i32_0, %c0_i32_1 : i32, i32, i32, i32
  }
  func.func @transform_1(%arg0: i32, %arg1: i32) -> (i32, i32) {
    %c0_i32 = arith.constant 0 : i32
    %c0_i32_0 = arith.constant 0 : i32
    %c0_i32_1 = arith.constant 0 : i32
    return %c0_i32, %c0_i32_0 : i32, i32
  }
  func.func @transform_2(%arg0: i32, %arg1: i32) -> (i32, i32) {
    %c0_i32 = arith.constant 0 : i32
    %c0_i32_0 = arith.constant 0 : i32
    %c0_i32_1 = arith.constant 0 : i32
    return %c0_i32, %c0_i32_0 : i32, i32
  }
  func.func @transform_3(%arg0: i32, %arg1: i32) -> (i32, i32, i32, i32) {
    %c0_i32 = arith.constant 0 : i32
    %c0_i32_0 = arith.constant 0 : i32
    %c0_i32_1 = arith.constant 0 : i32
    return %arg0, %arg1, %c0_i32, %c0_i32_0 : i32, i32, i32, i32
  }
}

</mosaic_0001>

<llo_original>
// kernel: tpu_custom_call.1
$region0: #{tpu_custom_call.1}
  #allocation0 [shape = 'u32[]', space=smem, size = 0x4, offset = 0x4, fixed_abs, tag = 'smem constant byte address 0x4 - core index']
  #allocation1 [shape = 'u32[144,128]{1,0:T(1,128)}', space=vmem, size = 0x12000, scoped, tag = 'internal scratch']
  %s0 = inlined_call_operand.vmem [shape: bf16[2,18,18,4], index: 0, kind: input, shape index: {}]
  %s1 = inlined_call_operand.vmem [shape: bf16[36,128], index: 1, kind: input, shape index: {}]
  %s2 = inlined_call_operand.vmem [shape: f32[1,128], index: 2, kind: input, shape index: {}]
  %s3 = inlined_call_operand.hbm [shape: bf16[2,16,16,128], index: 3, kind: output, shape index: {}]
  %s4 = sld [smem:[#allocation0]]
  $region45: #{tpu_custom_call.1} parent=0
    _
  %s6 = ssub.s32 1, %s4
  %s7 = scalar_select 0, %s6, %s4
  $region1: #{tpu_custom_call.1} parent=0
    #allocation2 [shape = 'u8[65536]{0}', space=vmem, size = 0x10000, scoped, tag = 'output window, operand 0']
    #allocation3 [shape = 's32[2]{0}', space=sflag, size = 0x8, scoped, tag = 'scoped memory for tpu_custom_call.1']
    %8 = vsyncpa [#allocation3], 0
    %s9 = scalar_lea.sflag [#allocation3], 1
    %10 = vsyncpa %s9, 0
    loop: start=0, step=1, limit=6
    $region2: #{tpu_custom_call.1} parent=1 // loop_pre_header
      _
    $region3: #{tpu_custom_call.1} parent=1 // loop_header
      %s12 = sphi 0, %s16
      %p13 = scmp.ge.s32.totalorder %s12, 6
      %s19 = sphi 0, %s31
      %s20 = sphi 0, %s27
      %s21 = sphi 0, %s19
      %s22 = sphi 0, %s20
      %s23 = sphi 0, %s21
      %s24 = sphi 0, %s22
      %s34 = sphi 0, %s36
      %s37 = sphi 0, %s34
      %s38 = sphi 0, %s37
      %s54 = sphi 0, %s38
      %s58 = sphi 0, %s58
      %s60 = sphi 0, %s58
      %s61 = sphi 0, %s60
      %s75 = sphi 0, %s61
      %s79 = sphi 0, %s79
      %s81 = sphi 0, %s79
      %s82 = sphi 0, %s81
      %s96 = sphi 0, %s82
      %s104 = sphi 0, %s106
      %s107 = sphi 0, %s104
      %s108 = sphi 0, %s107
      %s124 = sphi 0, %s108
    $region4: #{tpu_custom_call.1} parent=1 // loop_header_branch
      %15 = sbr.rel (%p13) target = $region8
    $region5: #{tpu_custom_call.1} parent=1 // loop_body
      %s17 = ssub.s32 %s12, 1
      %s18 = ssub.s32 %s12, 2
      %s25 = sadd.s32 1, %s20
      %p26 = scmp.ge.s32.totalorder %s25, 2
      %s27 = scalar_select %p26, 0, %s25
      %s28 = sadd.s32 1, %s19
      %s29 = scalar_select %p26, %s28, %s19
      %p30 = scmp.ge.s32.totalorder %s29, 2
      %s31 = scalar_select %p30, 0, %s29
      %s32 = ssub.s32 %s19, %s31
      %p33 = scmp.eq.s32.totalorder %s32, 0
      %s35 = sadd.s32 %s34, 1
      %s36 = scalar_select %p33, %s34, %s35
      %p39 = pneg %p33
      %p40 = scmp.eq.s32.totalorder %s12, 3
      %p41 = por %p39, %p40
      %p42 = scmp.ne.s32.totalorder %s34, %s37
      %p43 = scmp.eq.s32.totalorder %s12, 0
      %p44 = por %p42, %p43
      %p45 = scmp.ne.s32.totalorder %s34, %s37
      %p46 = scmp.eq.s32.totalorder %s17, 3
      %p47 = por %p45, %p46
      %p48 = scmp.ne.s32.totalorder %s37, %s38
      %p49 = scmp.eq.s32.totalorder %s17, 0
      %p50 = por %p48, %p49
      %p51 = scmp.ne.s32.totalorder %s37, %s38
      %p52 = scmp.eq.s32.totalorder %s18, 3
      %p53 = por %p51, %p52
      %p55 = scmp.ne.s32.totalorder %s38, %s54
      %p56 = scmp.eq.s32.totalorder %s18, 0
      %p57 = por %p55, %p56
      %s59 = sadd.s32 %s58, 1
      %p62 = scmp.eq.s32.totalorder %s12, 3
      %p63 = scmp.ne.s32.totalorder %s58, %s60
      %p64 = scmp.eq.s32.totalorder %s12, 0
      %p65 = por %p63, %p64
      %p66 = scmp.ne.s32.totalorder %s58, %s60
      %p67 = scmp.eq.s32.totalorder %s17, 3
      %p68 = por %p66, %p67
      %p69 = scmp.ne.s32.totalorder %s60, %s61
      %p70 = scmp.eq.s32.totalorder %s17, 0
      %p71 = por %p69, %p70
      %p72 = scmp.ne.s32.totalorder %s60, %s61
      %p73 = scmp.eq.s32.totalorder %s18, 3
      %p74 = por %p72, %p73
      %p76 = scmp.ne.s32.totalorder %s61, %s75
      %p77 = scmp.eq.s32.totalorder %s18, 0
      %p78 = por %p76, %p77
      %s80 = sadd.s32 %s79, 1
      %p83 = scmp.eq.s32.totalorder %s12, 3
      %p84 = scmp.ne.s32.totalorder %s79, %s81
      %p85 = scmp.eq.s32.totalorder %s12, 0
      %p86 = por %p84, %p85
      %p87 = scmp.ne.s32.totalorder %s79, %s81
      %p88 = scmp.eq.s32.totalorder %s17, 3
      %p89 = por %p87, %p88
      %p90 = scmp.ne.s32.totalorder %s81, %s82
      %p91 = scmp.eq.s32.totalorder %s17, 0
      %p92 = por %p90, %p91
      %p93 = scmp.ne.s32.totalorder %s81, %s82
      %p94 = scmp.eq.s32.totalorder %s18, 3
      %p95 = por %p93, %p94
      %p97 = scmp.ne.s32.totalorder %s82, %s96
      %p98 = scmp.eq.s32.totalorder %s18, 0
      %p99 = por %p97, %p98
      %s100 = ssub.s32 %s19, %s31
      %s101 = ssub.s32 %s20, %s27
      %s102 = sor.u32 %s100, %s101
      %p103 = scmp.eq.s32.totalorder %s102, 0
      %s105 = sadd.s32 %s104, 1
      %s106 = scalar_select %p103, %s104, %s105
      %p109 = pneg %p103
      %p110 = scmp.eq.s32.totalorder %s12, 3
      %p111 = por %p109, %p110
      %p112 = scmp.ne.s32.totalorder %s104, %s107
      %p113 = scmp.eq.s32.totalorder %s12, 0
      %p114 = por %p112, %p113
      %p115 = scmp.ne.s32.totalorder %s104, %s107
      %p116 = scmp.eq.s32.totalorder %s17, 3
      %p117 = por %p115, %p116
      %p118 = scmp.ne.s32.totalorder %s107, %s108
      %p119 = scmp.eq.s32.totalorder %s17, 0
      %p120 = por %p118, %p119
      %p121 = scmp.ne.s32.totalorder %s107, %s108
      %p122 = scmp.eq.s32.totalorder %s18, 3
      %p123 = por %p121, %p122
      %p125 = scmp.ne.s32.totalorder %s108, %s124
      %p126 = scmp.eq.s32.totalorder %s18, 0
      %p127 = por %p125, %p126
      %p128 = scmp.le.s32.totalorder 1, %s12
      %p129 = scmp.lt.s32.totalorder %s12, 5
      %p130 = pnand %p128, %p129
      %p131 = pneg %p130
      // Predicated region
      $region9: #{tpu_custom_call.1} parent=5 // pred_check
        _
      $region10: #{tpu_custom_call.1} parent=5 // pred_check_branch
        %133 = sbr.rel (%p130) target = $region12
      $region11: #{tpu_custom_call.1} parent=5 // pred_region
        %s134 = ssub.s32 %s12, 1
        // Predicated region
        $region13: #{tpu_custom_call.1} parent=11 // pred_check
          %p135 = pneg %p71
        $region14: #{tpu_custom_call.1} parent=11 // pred_check_branch
          %137 = sbr.rel (%p135) target = $region16
        $region15: #{tpu_custom_call.1} parent=11 // pred_region
          _
        $region16: #{tpu_custom_call.1} parent=11 // pred_fallthru
          _
        // Predicated region
        $region17: #{tpu_custom_call.1} parent=11 // pred_check
          %p138 = pneg %p92
        $region18: #{tpu_custom_call.1} parent=11 // pred_check_branch
          %140 = sbr.rel (%p138) target = $region20
        $region19: #{tpu_custom_call.1} parent=11 // pred_region
          _
        $region20: #{tpu_custom_call.1} parent=11 // pred_fallthru
          _
      $region12: #{tpu_custom_call.1} parent=5 // pred_fallthru
        _
      %p141 = scmp.lt.s32.totalorder %s12, 4
      // Predicated region
      $region21: #{tpu_custom_call.1} parent=5 // pred_check
        %p142 = pneg %p141
      $region22: #{tpu_custom_call.1} parent=5 // pred_check_branch
        %144 = sbr.rel (%p142) target = $region24
      $region23: #{tpu_custom_call.1} parent=5 // pred_region
        // Predicated region
        $region25: #{tpu_custom_call.1} parent=23 // pred_check
          %p145 = pneg %p44
        $region26: #{tpu_custom_call.1} parent=23 // pred_check_branch
          %147 = sbr.rel (%p145) target = $region28
        $region27: #{tpu_custom_call.1} parent=23 // pred_region
          %p148 = scmp.lt.s32.totalorder %s19, 1
          %s149 = scalar_select %p148, %s19, 1
          %s150 = smul.addr %s149, 54
          %s151 = smul.addr %s150, 4
          %s152 = scalar_lea.vmem %s0, %s151
        $region28: #{tpu_custom_call.1} parent=23 // pred_fallthru
          _
      $region24: #{tpu_custom_call.1} parent=5 // pred_fallthru
        _
      %p153 = scmp.le.s32.totalorder 1, %s12
      %p154 = scmp.lt.s32.totalorder %s12, 5
      %p155 = pnand %p153, %p154
      %p156 = pneg %p155
      // Predicated region
      $region29: #{tpu_custom_call.1} parent=5 // pred_check
        _
      $region30: #{tpu_custom_call.1} parent=5 // pred_check_branch
        %158 = sbr.rel (%p155) target = $region32
      $region31: #{tpu_custom_call.1} parent=5 // pred_region
        %s159 = ssub.s32 %s12, 1
        %p160 = scmp.lt.s32.totalorder %s21, 1
        %s161 = scalar_select %p160, %s21, 1
        %s162 = smul.addr %s161, 54
        %s163 = smul.addr %s162, 4
        %s164 = scalar_lea.vmem %s0, %s163
        %p165 = pneg %p50
        %p166 = pneg %p47
        %p167 = pneg %p71
        %p168 = pneg %p68
        %p169 = pneg %p92
        %p170 = pneg %p89
        %p171 = pneg %p120
        %p172 = pneg %p117
        %s173 = sand.u32 %s107, 1
        %s174 = scalar_lea.sflag [#allocation3], %s173
        %s175 = sand.u32 %s107, 1
        %s176 = smul.addr %s175, 64
        %s177 = scalar_lea.vmem [#allocation2], %s176
        %p178 = scmp.lt.s32.totalorder %s21, 1
        %s179 = scalar_select %p178, %s21, 1
        %s180 = smul.addr %s179, 54
        %s181 = smul.addr %s180, 4
        %s182 = scalar_lea.vmem %s0, %s181
        %s183 = smul.u32 8, %s22
        %s185 = smul.u32 %s22, 8
        %s186 = smul.u32 %s185, 3
        %s187 = smul.addr %s186, 4
        %s188 = scalar_lea.vmem %s182, %s187
        %v189 = vld [vmem:[%s188] sm:$0xf]
        %v190 = vld [vmem:[%s188 + $0x4] sm:$0xf]
        %v191 = vld [vmem:[%s188 + $0x8] sm:$0x1]
        %v192 = vld [vmem:[%s188 + $0xc] sm:$0xf]
        %v193 = vld [vmem:[%s188 + $0x10] sm:$0xf]
        %v194 = vld [vmem:[%s188 + $0x14] sm:$0x1]
        %v195 = vld [vmem:[%s188 + $0x18] sm:$0xf]
        %v196 = vld [vmem:[%s188 + $0x1c] sm:$0xf]
        %v197 = vld [vmem:[%s188 + $0x20] sm:$0x1]
        %v198 = vld [vmem:[%s188 + $0x24] sm:$0xf]
        %v199 = vld [vmem:[%s188 + $0x28] sm:$0xf]
        %v200 = vld [vmem:[%s188 + $0x2c] sm:$0x1]
        %v201 = vld [vmem:[%s188 + $0x30] sm:$0xf]
        %v202 = vld [vmem:[%s188 + $0x34] sm:$0xf]
        %v203 = vld [vmem:[%s188 + $0x38] sm:$0x1]
        %v204 = vld [vmem:[%s188 + $0x3c] sm:$0xf]
        %v205 = vld [vmem:[%s188 + $0x40] sm:$0xf]
        %v206 = vld [vmem:[%s188 + $0x44] sm:$0x1]
        %v207 = vld [vmem:[%s188 + $0x48] sm:$0xf]
        %v208 = vld [vmem:[%s188 + $0x4c] sm:$0xf]
        %v209 = vld [vmem:[%s188 + $0x50] sm:$0x1]
        %v210 = vld [vmem:[%s188 + $0x54] sm:$0xf]
        %v211 = vld [vmem:[%s188 + $0x58] sm:$0xf]
        %v212 = vld [vmem:[%s188 + $0x5c] sm:$0x1]
        %v213 = vld [vmem:[%s188 + $0x60] sm:$0xf]
        %v214 = vld [vmem:[%s188 + $0x64] sm:$0xf]
        %v215 = vld [vmem:[%s188 + $0x68] sm:$0x1]
        %v216 = vld [vmem:[%s188 + $0x6c] sm:$0xf]
        %v217 = vld [vmem:[%s188 + $0x70] sm:$0xf]
        %v218 = vld [vmem:[%s188 + $0x74] sm:$0x1]
        %v219 = vld [vmem:[%s1] sm:$0x3]
        %vm220 = vsmask.f32 3328
        %vm221 = vsmask.f32 7440
        %vm222 = vmor %vm220, %vm221
        %v224 = vshrl.u32 %v189, 16
        %v226 = vrot.slane %v224, 4
        %v227 = vshll.u32 %v189, 16
        %v229 = vrot.slane %v227, 5
        %v230 = vor.u32 %v226, %v229
        %v231 = vrot.slane %v230, 4
        %v233 = vshll.u32 %v190, 16
        %v235 = vrot.slane %v233, 5
        %v236 = vsel %vm222, %v231, %v235
        %v237 = vshrl.u32 %v190, 16
        %v239 = vrot.slane %v237, 4
        %v240 = vor.u32 %v239, %v235
        %v241 = vrot.slane %v240, 4
        %v243 = vshll.u32 %v191, 16
        %v245 = vrot.slane %v243, 5
        %v246 = vsel %vm222, %v241, %v245
        %v248 = vshrl.u32 %v192, 16
        %v250 = vrot.slane %v248, 4
        %v251 = vshll.u32 %v192, 16
        %v253 = vrot.slane %v251, 5
        %v254 = vor.u32 %v250, %v253
        %v255 = vrot.slane %v254, 4
        %v257 = vshll.u32 %v193, 16
        %v259 = vrot.slane %v257, 5
        %v260 = vsel %vm222, %v255, %v259
        %v261 = vshrl.u32 %v193, 16
        %v263 = vrot.slane %v261, 4
        %v264 = vor.u32 %v263, %v259
        %v265 = vrot.slane %v264, 4
        %v267 = vshll.u32 %v194, 16
        %v269 = vrot.slane %v267, 5
        %v270 = vsel %vm222, %v265, %v269
        %v272 = vshrl.u32 %v195, 16
        %v274 = vrot.slane %v272, 4
        %v275 = vshll.u32 %v195, 16
        %v277 = vrot.slane %v275, 5
        %v278 = vor.u32 %v274, %v277
        %v279 = vrot.slane %v278, 4
        %v281 = vshll.u32 %v196, 16
        %v283 = vrot.slane %v281, 5
        %v284 = vsel %vm222, %v279, %v283
        %v285 = vshrl.u32 %v196, 16
        %v287 = vrot.slane %v285, 4
        %v288 = vor.u32 %v287, %v283
        %v289 = vrot.slane %v288, 4
        %v291 = vshll.u32 %v197, 16
        %v293 = vrot.slane %v291, 5
        %v294 = vsel %vm222, %v289, %v293
        %v296 = vshrl.u32 %v198, 16
        %v298 = vrot.slane %v296, 4
        %v299 = vshll.u32 %v198, 16
        %v301 = vrot.slane %v299, 5
        %v302 = vor.u32 %v298, %v301
        %v303 = vrot.slane %v302, 4
        %v305 = vshll.u32 %v199, 16
        %v307 = vrot.slane %v305, 5
        %v308 = vsel %vm222, %v303, %v307
        %v309 = vshrl.u32 %v199, 16
        %v311 = vrot.slane %v309, 4
        %v312 = vor.u32 %v311, %v307
        %v313 = vrot.slane %v312, 4
        %v315 = vshll.u32 %v200, 16
        %v317 = vrot.slane %v315, 5
        %v318 = vsel %vm222, %v313, %v317
        %v320 = vshrl.u32 %v201, 16
        %v322 = vrot.slane %v320, 4
        %v323 = vshll.u32 %v201, 16
        %v325 = vrot.slane %v323, 5
        %v326 = vor.u32 %v322, %v325
        %v327 = vrot.slane %v326, 4
        %v329 = vshll.u32 %v202, 16
        %v331 = vrot.slane %v329, 5
        %v332 = vsel %vm222, %v327, %v331
        %v333 = vshrl.u32 %v202, 16
        %v335 = vrot.slane %v333, 4
        %v336 = vor.u32 %v335, %v331
        %v337 = vrot.slane %v336, 4
        %v339 = vshll.u32 %v203, 16
        %v341 = vrot.slane %v339, 5
        %v342 = vsel %vm222, %v337, %v341
        %v344 = vshrl.u32 %v204, 16
        %v346 = vrot.slane %v344, 4
        %v347 = vshll.u32 %v204, 16
        %v349 = vrot.slane %v347, 5
        %v350 = vor.u32 %v346, %v349
        %v351 = vrot.slane %v350, 4
        %v353 = vshll.u32 %v205, 16
        %v355 = vrot.slane %v353, 5
        %v356 = vsel %vm222, %v351, %v355
        %v357 = vshrl.u32 %v205, 16
        %v359 = vrot.slane %v357, 4
        %v360 = vor.u32 %v359, %v355
        %v361 = vrot.slane %v360, 4
        %v363 = vshll.u32 %v206, 16
        %v365 = vrot.slane %v363, 5
        %v366 = vsel %vm222, %v361, %v365
        %v368 = vshrl.u32 %v207, 16
        %v370 = vrot.slane %v368, 4
        %v371 = vshll.u32 %v207, 16
        %v373 = vrot.slane %v371, 5
        %v374 = vor.u32 %v370, %v373
        %v375 = vrot.slane %v374, 4
        %v377 = vshll.u32 %v208, 16
        %v379 = vrot.slane %v377, 5
        %v380 = vsel %vm222, %v375, %v379
        %v381 = vshrl.u32 %v208, 16
        %v383 = vrot.slane %v381, 4
        %v384 = vor.u32 %v383, %v379
        %v385 = vrot.slane %v384, 4
        %v387 = vshll.u32 %v209, 16
        %v389 = vrot.slane %v387, 5
        %v390 = vsel %vm222, %v385, %v389
        %v392 = vshrl.u32 %v210, 16
        %v394 = vrot.slane %v392, 4
        %v395 = vshll.u32 %v210, 16
        %v397 = vrot.slane %v395, 5
        %v398 = vor.u32 %v394, %v397
        %v399 = vrot.slane %v398, 4
        %v401 = vshll.u32 %v211, 16
        %v403 = vrot.slane %v401, 5
        %v404 = vsel %vm222, %v399, %v403
        %v405 = vshrl.u32 %v211, 16
        %v407 = vrot.slane %v405, 4
        %v408 = vor.u32 %v407, %v403
        %v409 = vrot.slane %v408, 4
        %v411 = vshll.u32 %v212, 16
        %v413 = vrot.slane %v411, 5
        %v414 = vsel %vm222, %v409, %v413
        %v415 = vld [vmem:[%s1] sm:$0xc]
        %v416 = vunpack.c.l.b16 %v236
        %v417 = vunpack.c.l.b16 %v246
        %v418 = vunpack.c.l.b16 %v260
        %v419 = vunpack.c.l.b16 %v270
        %v420 = vunpack.c.l.b16 %v284
        %v421 = vunpack.c.l.b16 %v294
        %v422 = vunpack.c.l.b16 %v308
        %v423 = vunpack.c.l.b16 %v318
        %v424 = vunpack.c.l.b16 %v332
        %v425 = vunpack.c.l.b16 %v342
        %v426 = vunpack.c.l.b16 %v356
        %v427 = vunpack.c.l.b16 %v366
        %v428 = vunpack.c.l.b16 %v380
        %v429 = vunpack.c.l.b16 %v390
        %v430 = vunpack.c.l.b16 %v404
        %v431 = vunpack.c.l.b16 %v414
        %v432 = vpack.c.b16 %v417, %v416
        %v433 = vpack.c.b16 %v419, %v418
        %v434 = vpack.c.b16 %v421, %v420
        %v435 = vpack.c.b16 %v423, %v422
        %v436 = vpack.c.b16 %v425, %v424
        %v437 = vpack.c.b16 %v427, %v426
        %v438 = vpack.c.b16 %v429, %v428
        %v439 = vpack.c.b16 %v431, %v430
        %v441 = vunpack.c.l.b16 %v415
        %v442 = vpack.c.b16 %v441, %v441
        %v443 = vrot.slane %v442, 2
        %vm444 = vcmask 31744
        %v446 = vsel %vm444, %v432, 0
        %v449 = vsel %vm444, %v433, 0
        %v452 = vsel %vm444, %v434, 0
        %v455 = vsel %vm444, %v435, 0
        %v458 = vsel %vm444, %v436, 0
        %v461 = vsel %vm444, %v437, 0
        %v464 = vsel %vm444, %v438, 0
        %v467 = vsel %vm444, %v439, 0
        %vm469 = vcmask 1041408
        %v471 = vsel %vm469, %v443, 0
        %473 = vmatprep.subr.bf16.mxu0 0
        %474 = vmatpush1.bf16.msra.mxu0 %v471
        %475 = vmatprep.subr.bf16.mxu0 0
        %476 = vmatpush1.bf16.msra.mxu0 0
        %477 = vmatprep.subr.bf16.mxu0 0
        %478 = vmatpush1.bf16.msra.mxu0 0
        %479 = vmatprep.subr.bf16.mxu0 0
        %480 = vmatpush1.bf16.msra.mxu0 0
        %481 = vmatprep.subr.bf16.mxu0 0
        %482 = vmatpush1.bf16.msra.mxu0 0
        %483 = vmatprep.subr.bf16.mxu0 0
        %484 = vmatpush1.bf16.msra.mxu0 0
        %485 = vmatprep.subr.bf16.mxu0 0
        %486 = vmatpush1.bf16.msra.mxu0 0
        %487 = vmatprep.subr.bf16.mxu0 0
        %488 = vmatpush1.bf16.msra.mxu0 0
        %489 = vmatprep.subr.bf16.mxu0 0
        %490 = vmatpush1.bf16.msra.mxu0 0
        %491 = vmatprep.subr.bf16.mxu0 0
        %492 = vmatpush1.bf16.msra.mxu0 0
        %493 = vmatprep.subr.bf16.mxu0 0
        %494 = vmatpush1.bf16.msra.mxu0 0
        %495 = vmatprep.subr.bf16.mxu0 0
        %496 = vmatpush1.bf16.msra.mxu0 0
        %497 = vmatprep.subr.bf16.mxu0 0
        %498 = vmatpush1.bf16.msra.mxu0 0
        %499 = vmatprep.subr.bf16.mxu0 0
        %500 = vmatpush1.bf16.msra.mxu0 0
        %501 = vmatprep.subr.bf16.mxu0 0
        %502 = vmatpush1.bf16.msra.mxu0 0
        %503 = vmatprep.subr.bf16.mxu0 0
        %504 = vmatpush1.bf16.msra.mxu0 0
        %505 = vmatprep.mubr.bf16.mxu0 0
        %506 = vmatmul.mubr.bf16.gmra.mrb[0].mxu0 %v446
        %v507 = vpop.f32.mrb[0].mxu0
        %v508 = vadd.f32 0.0, %v507
        %v509 = vpop.f32.mrb[0].mxu0
        %v510 = vpop.f32.mrb[0].mxu0
        %v511 = vadd.f32 0.0, %v510
        %v512 = vpop.f32.mrb[0].mxu0
        %513 = vmatprep.mubr.bf16.mxu0 0
        %514 = vmatmul.mubr.bf16.gmra.mrb[0].mxu0 %v449
        %v515 = vpop.f32.mrb[0].mxu0
        %v516 = vadd.f32 0.0, %v515
        %v517 = vpop.f32.mrb[0].mxu0
        %v518 = vpop.f32.mrb[0].mxu0
        %v519 = vadd.f32 0.0, %v518
        %v520 = vpop.f32.mrb[0].mxu0
        %521 = vmatprep.mubr.bf16.mxu0 0
        %522 = vmatmul.mubr.bf16.gmra.mrb[0].mxu0 %v452
        %v523 = vpop.f32.mrb[0].mxu0
        %v524 = vadd.f32 0.0, %v523
        %v525 = vpop.f32.mrb[0].mxu0
        %v526 = vpop.f32.mrb[0].mxu0
        %v527 = vadd.f32 0.0, %v526
        %v528 = vpop.f32.mrb[0].mxu0
        %529 = vmatprep.mubr.bf16.mxu0 0
        %530 = vmatmul.mubr.bf16.gmra.mrb[0].mxu0 %v455
        %v531 = vpop.f32.mrb[0].mxu0
        %v532 = vadd.f32 0.0, %v531
        %v533 = vpop.f32.mrb[0].mxu0
        %v534 = vpop.f32.mrb[0].mxu0
        %v535 = vadd.f32 0.0, %v534
        %v536 = vpop.f32.mrb[0].mxu0
        %537 = vmatprep.mubr.bf16.mxu0 0
        %538 = vmatmul.mubr.bf16.gmra.mrb[0].mxu0 %v458
        %v539 = vpop.f32.mrb[0].mxu0
        %v540 = vadd.f32 0.0, %v539
        %v541 = vpop.f32.mrb[0].mxu0
        %v542 = vpop.f32.mrb[0].mxu0
        %v543 = vadd.f32 0.0, %v542
        %v544 = vpop.f32.mrb[0].mxu0
        %545 = vmatprep.mubr.bf16.mxu0 0
        %546 = vmatmul.mubr.bf16.gmra.mrb[0].mxu0 %v461
        %v547 = vpop.f32.mrb[0].mxu0
        %v548 = vadd.f32 0.0, %v547
        %v549 = vpop.f32.mrb[0].mxu0
        %v550 = vpop.f32.mrb[0].mxu0
        %v551 = vadd.f32 0.0, %v550
        %v552 = vpop.f32.mrb[0].mxu0
        %553 = vmatprep.mubr.bf16.mxu0 0
        %554 = vmatmul.mubr.bf16.gmra.mrb[0].mxu0 %v464
        %v555 = vpop.f32.mrb[0].mxu0
        %v556 = vadd.f32 0.0, %v555
        %v557 = vpop.f32.mrb[0].mxu0
        %v558 = vpop.f32.mrb[0].mxu0
        %v559 = vadd.f32 0.0, %v558
        %v560 = vpop.f32.mrb[0].mxu0
        %561 = vmatprep.mubr.bf16.mxu0 0
        %562 = vmatmul.mubr.bf16.gmra.mrb[0].mxu0 %v467
        %v563 = vpop.f32.mrb[0].mxu0
        %v564 = vadd.f32 0.0, %v563
        %v565 = vpop.f32.mrb[0].mxu0
        %v566 = vpop.f32.mrb[0].mxu0
        %v567 = vadd.f32 0.0, %v566
        %v568 = vpop.f32.mrb[0].mxu0
        %569 = vdwg.mxu0
        %v586 = vunpack.c.l.b16 %v189
        %v587 = vunpack.c.l.b16 %v190
        %v588 = vunpack.c.l.b16 %v192
        %v589 = vunpack.c.l.b16 %v193
        %v590 = vunpack.c.l.b16 %v195
        %v591 = vunpack.c.l.b16 %v196
        %v592 = vunpack.c.l.b16 %v198
        %v593 = vunpack.c.l.b16 %v199
        %v594 = vunpack.c.l.b16 %v201
        %v595 = vunpack.c.l.b16 %v202
        %v596 = vunpack.c.l.b16 %v204
        %v597 = vunpack.c.l.b16 %v205
        %v598 = vunpack.c.l.b16 %v207
        %v599 = vunpack.c.l.b16 %v208
        %v600 = vunpack.c.l.b16 %v210
        %v601 = vunpack.c.l.b16 %v211
        %v602 = vpack.c.b16 %v587, %v586
        %v603 = vpack.c.b16 %v589, %v588
        %v604 = vpack.c.b16 %v591, %v590
        %v605 = vpack.c.b16 %v593, %v592
        %v606 = vpack.c.b16 %v595, %v594
        %v607 = vpack.c.b16 %v597, %v596
        %v608 = vpack.c.b16 %v599, %v598
        %v609 = vpack.c.b16 %v601, %v600
        %v611 = vsel %vm444, %v602, 0
        %v614 = vsel %vm444, %v603, 0
        %v617 = vsel %vm444, %v604, 0
        %v620 = vsel %vm444, %v605, 0
        %v623 = vsel %vm444, %v606, 0
        %v626 = vsel %vm444, %v607, 0
        %v629 = vsel %vm444, %v608, 0
        %v632 = vsel %vm444, %v609, 0
        %v635 = vsel %vm469, %v219, 0
        %637 = vmatprep.subr.bf16.mxu0 0
        %638 = vmatpush1.bf16.msra.mxu0 %v635
        %639 = vmatprep.subr.bf16.mxu0 0
        %640 = vmatpush1.bf16.msra.mxu0 0
        %641 = vmatprep.subr.bf16.mxu0 0
        %642 = vmatpush1.bf16.msra.mxu0 0
        %643 = vmatprep.subr.bf16.mxu0 0
        %644 = vmatpush1.bf16.msra.mxu0 0
        %645 = vmatprep.subr.bf16.mxu0 0
        %646 = vmatpush1.bf16.msra.mxu0 0
        %647 = vmatprep.subr.bf16.mxu0 0
        %648 = vmatpush1.bf16.msra.mxu0 0
        %649 = vmatprep.subr.bf16.mxu0 0
        %650 = vmatpush1.bf16.msra.mxu0 0
        %651 = vmatprep.subr.bf16.mxu0 0
        %652 = vmatpush1.bf16.msra.mxu0 0
        %653 = vmatprep.subr.bf16.mxu0 0
        %654 = vmatpush1.bf16.msra.mxu0 0
        %655 = vmatprep.subr.bf16.mxu0 0
        %656 = vmatpush1.bf16.msra.mxu0 0
        %657 = vmatprep.subr.bf16.mxu0 0
        %658 = vmatpush1.bf16.msra.mxu0 0
        %659 = vmatprep.subr.bf16.mxu0 0
        %660 = vmatpush1.bf16.msra.mxu0 0
        %661 = vmatprep.subr.bf16.mxu0 0
        %662 = vmatpush1.bf16.msra.mxu0 0
        %663 = vmatprep.subr.bf16.mxu0 0
        %664 = vmatpush1.bf16.msra.mxu0 0
        %665 = vmatprep.subr.bf16.mxu0 0
        %666 = vmatpush1.bf16.msra.mxu0 0
        %667 = vmatprep.subr.bf16.mxu0 0
        %668 = vmatpush1.bf16.msra.mxu0 0
        %669 = vmatprep.mubr.bf16.mxu0 0
        %670 = vmatmul.mubr.bf16.gmra.mrb[0].mxu0 %v611
        %v671 = vpop.f32.mrb[0].mxu0
        %v672 = vadd.f32 %v508, %v671
        %v673 = vpop.f32.mrb[0].mxu0
        %v674 = vpop.f32.mrb[0].mxu0
        %v675 = vadd.f32 %v511, %v674
        %v676 = vpop.f32.mrb[0].mxu0
        %677 = vmatprep.mubr.bf16.mxu0 0
        %678 = vmatmul.mubr.bf16.gmra.mrb[0].mxu0 %v614
        %v679 = vpop.f32.mrb[0].mxu0
        %v680 = vadd.f32 %v516, %v679
        %v681 = vpop.f32.mrb[0].mxu0
        %v682 = vpop.f32.mrb[0].mxu0
        %v683 = vadd.f32 %v519, %v682
        %v684 = vpop.f32.mrb[0].mxu0
        %685 = vmatprep.mubr.bf16.mxu0 0
        %686 = vmatmul.mubr.bf16.gmra.mrb[0].mxu0 %v617
        %v687 = vpop.f32.mrb[0].mxu0
        %v688 = vadd.f32 %v524, %v687
        %v689 = vpop.f32.mrb[0].mxu0
        %v690 = vpop.f32.mrb[0].mxu0
        %v691 = vadd.f32 %v527, %v690
        %v692 = vpop.f32.mrb[0].mxu0
        %693 = vmatprep.mubr.bf16.mxu0 0
        %694 = vmatmul.mubr.bf16.gmra.mrb[0].mxu0 %v620
        %v695 = vpop.f32.mrb[0].mxu0
        %v696 = vadd.f32 %v532, %v695
        %v697 = vpop.f32.mrb[0].mxu0
        %v698 = vpop.f32.mrb[0].mxu0
        %v699 = vadd.f32 %v535, %v698
        %v700 = vpop.f32.mrb[0].mxu0
        %701 = vmatprep.mubr.bf16.mxu0 0
        %702 = vmatmul.mubr.bf16.gmra.mrb[0].mxu0 %v623
        %v703 = vpop.f32.mrb[0].mxu0
        %v704 = vadd.f32 %v540, %v703
        %v705 = vpop.f32.mrb[0].mxu0
        %v706 = vpop.f32.mrb[0].mxu0
        %v707 = vadd.f32 %v543, %v706
        %v708 = vpop.f32.mrb[0].mxu0
        %709 = vmatprep.mubr.bf16.mxu0 0
        %710 = vmatmul.mubr.bf16.gmra.mrb[0].mxu0 %v626
        %v711 = vpop.f32.mrb[0].mxu0
        %v712 = vadd.f32 %v548, %v711
        %v713 = vpop.f32.mrb[0].mxu0
        %v714 = vpop.f32.mrb[0].mxu0
        %v715 = vadd.f32 %v551, %v714
        %v716 = vpop.f32.mrb[0].mxu0
        %717 = vmatprep.mubr.bf16.mxu0 0
        %718 = vmatmul.mubr.bf16.gmra.mrb[0].mxu0 %v629
        %v719 = vpop.f32.mrb[0].mxu0
        %v720 = vadd.f32 %v556, %v719
        %v721 = vpop.f32.mrb[0].mxu0
        %v722 = vpop.f32.mrb[0].mxu0
        %v723 = vadd.f32 %v559, %v722
        %v724 = vpop.f32.mrb[0].mxu0
        %725 = vmatprep.mubr.bf16.mxu0 0
        %726 = vmatmul.mubr.bf16.gmra.mrb[0].mxu0 %v632
        %v727 = vpop.f32.mrb[0].mxu0
        %v728 = vadd.f32 %v564, %v727
        %v729 = vpop.f32.mrb[0].mxu0
        %v730 = vpop.f32.mrb[0].mxu0
        %v731 = vadd.f32 %v567, %v730
        %v732 = vpop.f32.mrb[0].mxu0
        %733 = vdwg.mxu0
        %vm742 = vcmask 1042432
        %vm743 = vcmask 1046532
        %vm744 = vmor %vm742, %vm743
        %v745 = vrot.slane %v189, 5
        %v746 = vrot.slane %v745, 4
        %v747 = vrot.slane %v190, 5
        %v748 = vsel %vm744, %v746, %v747
        %v749 = vrot.slane %v747, 4
        %v750 = vrot.slane %v191, 5
        %v751 = vsel %vm744, %v749, %v750
        %v752 = vrot.slane %v192, 5
        %v753 = vrot.slane %v752, 4
        %v754 = vrot.slane %v193, 5
        %v755 = vsel %vm744, %v753, %v754
        %v756 = vrot.slane %v754, 4
        %v757 = vrot.slane %v194, 5
        %v758 = vsel %vm744, %v756, %v757
        %v759 = vrot.slane %v195, 5
        %v760 = vrot.slane %v759, 4
        %v761 = vrot.slane %v196, 5
        %v762 = vsel %vm744, %v760, %v761
        %v763 = vrot.slane %v761, 4
        %v764 = vrot.slane %v197, 5
        %v765 = vsel %vm744, %v763, %v764
        %v766 = vrot.slane %v198, 5
        %v767 = vrot.slane %v766, 4
        %v768 = vrot.slane %v199, 5
        %v769 = vsel %vm744, %v767, %v768
        %v770 = vrot.slane %v768, 4
        %v771 = vrot.slane %v200, 5
        %v772 = vsel %vm744, %v770, %v771
        %v773 = vrot.slane %v201, 5
        %v774 = vrot.slane %v773, 4
        %v775 = vrot.slane %v202, 5
        %v776 = vsel %vm744, %v774, %v775
        %v777 = vrot.slane %v775, 4
        %v778 = vrot.slane %v203, 5
        %v779 = vsel %vm744, %v777, %v778
        %v780 = vrot.slane %v204, 5
        %v781 = vrot.slane %v780, 4
        %v782 = vrot.slane %v205, 5
        %v783 = vsel %vm744, %v781, %v782
        %v784 = vrot.slane %v782, 4
        %v785 = vrot.slane %v206, 5
        %v786 = vsel %vm744, %v784, %v785
        %v787 = vrot.slane %v207, 5
        %v788 = vrot.slane %v787, 4
        %v789 = vrot.slane %v208, 5
        %v790 = vsel %vm744, %v788, %v789
        %v791 = vrot.slane %v789, 4
        %v792 = vrot.slane %v209, 5
        %v793 = vsel %vm744, %v791, %v792
        %v794 = vrot.slane %v210, 5
        %v795 = vrot.slane %v794, 4
        %v796 = vrot.slane %v211, 5
        %v797 = vsel %vm744, %v795, %v796
        %v798 = vrot.slane %v796, 4
        %v799 = vrot.slane %v212, 5
        %v800 = vsel %vm744, %v798, %v799
        %v801 = vld [vmem:[%s1 + $0x4] sm:$0x3]
        %v802 = vunpack.c.l.b16 %v748
        %v803 = vunpack.c.l.b16 %v751
        %v804 = vunpack.c.l.b16 %v755
        %v805 = vunpack.c.l.b16 %v758
        %v806 = vunpack.c.l.b16 %v762
        %v807 = vunpack.c.l.b16 %v765
        %v808 = vunpack.c.l.b16 %v769
        %v809 = vunpack.c.l.b16 %v772
        %v810 = vunpack.c.l.b16 %v776
        %v811 = vunpack.c.l.b16 %v779
        %v812 = vunpack.c.l.b16 %v783
        %v813 = vunpack.c.l.b16 %v786
        %v814 = vunpack.c.l.b16 %v790
        %v815 = vunpack.c.l.b16 %v793
        %v816 = vunpack.c.l.b16 %v797
        %v817 = vunpack.c.l.b16 %v800
        %v818 = vpack.c.b16 %v803, %v802
        %v819 = vpack.c.b16 %v805, %v804
        %v820 = vpack.c.b16 %v807, %v806
        %v821 = vpack.c.b16 %v809, %v808
        %v822 = vpack.c.b16 %v811, %v810
        %v823 = vpack.c.b16 %v813, %v812
        %v824 = vpack.c.b16 %v815, %v814
        %v825 = vpack.c.b16 %v817, %v816
        %v827 = vsel %vm444, %v818, 0
        %v830 = vsel %vm444, %v819, 0
        %v833 = vsel %vm444, %v820, 0
        %v836 = vsel %vm444, %v821, 0
        %v839 = vsel %vm444, %v822, 0
        %v842 = vsel %vm444, %v823, 0
        %v845 = vsel %vm444, %v824, 0
        %v848 = vsel %vm444, %v825, 0
        %v851 = vsel %vm469, %v801, 0
        %853 = vmatprep.subr.bf16.mxu0 0
        %854 = vmatpush1.bf16.msra.mxu0 %v851
        %855 = vmatprep.subr.bf16.mxu0 0
        %856 = vmatpush1.bf16.msra.mxu0 0
        %857 = vmatprep.subr.bf16.mxu0 0
        %858 = vmatpush1.bf16.msra.mxu0 0
        %859 = vmatprep.subr.bf16.mxu0 0
        %860 = vmatpush1.bf16.msra.mxu0 0
        %861 = vmatprep.subr.bf16.mxu0 0
        %862 = vmatpush1.bf16.msra.mxu0 0
        %863 = vmatprep.subr.bf16.mxu0 0
        %864 = vmatpush1.bf16.msra.mxu0 0
        %865 = vmatprep.subr.bf16.mxu0 0
        %866 = vmatpush1.bf16.msra.mxu0 0
        %867 = vmatprep.subr.bf16.mxu0 0
        %868 = vmatpush1.bf16.msra.mxu0 0
        %869 = vmatprep.subr.bf16.mxu0 0
        %870 = vmatpush1.bf16.msra.mxu0 0
        %871 = vmatprep.subr.bf16.mxu0 0
        %872 = vmatpush1.bf16.msra.mxu0 0
        %873 = vmatprep.subr.bf16.mxu0 0
        %874 = vmatpush1.bf16.msra.mxu0 0
        %875 = vmatprep.subr.bf16.mxu0 0
        %876 = vmatpush1.bf16.msra.mxu0 0
        %877 = vmatprep.subr.bf16.mxu0 0
        %878 = vmatpush1.bf16.msra.mxu0 0
        %879 = vmatprep.subr.bf16.mxu0 0
        %880 = vmatpush1.bf16.msra.mxu0 0
        %881 = vmatprep.subr.bf16.mxu0 0
        %882 = vmatpush1.bf16.msra.mxu0 0
        %883 = vmatprep.subr.bf16.mxu0 0
        %884 = vmatpush1.bf16.msra.mxu0 0
        %885 = vmatprep.mubr.bf16.mxu0 0
        %886 = vmatmul.mubr.bf16.gmra.mrb[0].mxu0 %v827
        %v887 = vpop.f32.mrb[0].mxu0
        %v888 = vadd.f32 0.0, %v887
        %v889 = vpop.f32.mrb[0].mxu0
        %v890 = vpop.f32.mrb[0].mxu0
        %v891 = vadd.f32 0.0, %v890
        %v892 = vpop.f32.mrb[0].mxu0
        %893 = vmatprep.mubr.bf16.mxu0 0
        %894 = vmatmul.mubr.bf16.gmra.mrb[0].mxu0 %v830
        %v895 = vpop.f32.mrb[0].mxu0
        %v896 = vadd.f32 0.0, %v895
        %v897 = vpop.f32.mrb[0].mxu0
        %v898 = vpop.f32.mrb[0].mxu0
        %v899 = vadd.f32 0.0, %v898
        %v900 = vpop.f32.mrb[0].mxu0
        %901 = vmatprep.mubr.bf16.mxu0 0
        %902 = vmatmul.mubr.bf16.gmra.mrb[0].mxu0 %v833
        %v903 = vpop.f32.mrb[0].mxu0
        %v904 = vadd.f32 0.0, %v903
        %v905 = vpop.f32.mrb[0].mxu0
        %v906 = vpop.f32.mrb[0].mxu0
        %v907 = vadd.f32 0.0, %v906
        %v908 = vpop.f32.mrb[0].mxu0
        %909 = vmatprep.mubr.bf16.mxu0 0
        %910 = vmatmul.mubr.bf16.gmra.mrb[0].mxu0 %v836
        %v911 = vpop.f32.mrb[0].mxu0
        %v912 = vadd.f32 0.0, %v911
        %v913 = vpop.f32.mrb[0].mxu0
        %v914 = vpop.f32.mrb[0].mxu0
        %v915 = vadd.f32 0.0, %v914
        %v916 = vpop.f32.mrb[0].mxu0
        %917 = vmatprep.mubr.bf16.mxu0 0
        %918 = vmatmul.mubr.bf16.gmra.mrb[0].mxu0 %v839
        %v919 = vpop.f32.mrb[0].mxu0
        %v920 = vadd.f32 0.0, %v919
        %v921 = vpop.f32.mrb[0].mxu0
        %v922 = vpop.f32.mrb[0].mxu0
        %v923 = vadd.f32 0.0, %v922
        %v924 = vpop.f32.mrb[0].mxu0
        %925 = vmatprep.mubr.bf16.mxu0 0
        %926 = vmatmul.mubr.bf16.gmra.mrb[0].mxu0 %v842
        %v927 = vpop.f32.mrb[0].mxu0
        %v928 = vadd.f32 0.0, %v927
        %v929 = vpop.f32.mrb[0].mxu0
        %v930 = vpop.f32.mrb[0].mxu0
        %v931 = vadd.f32 0.0, %v930
        %v932 = vpop.f32.mrb[0].mxu0
        %933 = vmatprep.mubr.bf16.mxu0 0
        %934 = vmatmul.mubr.bf16.gmra.mrb[0].mxu0 %v845
        %v935 = vpop.f32.mrb[0].mxu0
        %v936 = vadd.f32 0.0, %v935
        %v937 = vpop.f32.mrb[0].mxu0
        %v938 = vpop.f32.mrb[0].mxu0
        %v939 = vadd.f32 0.0, %v938
        %v940 = vpop.f32.mrb[0].mxu0
        %941 = vmatprep.mubr.bf16.mxu0 0
        %942 = vmatmul.mubr.bf16.gmra.mrb[0].mxu0 %v848
        %v943 = vpop.f32.mrb[0].mxu0
        %v944 = vadd.f32 0.0, %v943
        %v945 = vpop.f32.mrb[0].mxu0
        %v946 = vpop.f32.mrb[0].mxu0
        %v947 = vadd.f32 0.0, %v946
        %v948 = vpop.f32.mrb[0].mxu0
        %949 = vdwg.mxu0
        %v950 = vadd.f32 %v672, %v888
        %v951 = vadd.f32 %v675, %v891
        %v952 = vadd.f32 %v680, %v896
        %v953 = vadd.f32 %v683, %v899
        %v954 = vadd.f32 %v688, %v904
        %v955 = vadd.f32 %v691, %v907
        %v956 = vadd.f32 %v696, %v912
        %v957 = vadd.f32 %v699, %v915
        %v958 = vadd.f32 %v704, %v920
        %v959 = vadd.f32 %v707, %v923
        %v960 = vadd.f32 %v712, %v928
        %v961 = vadd.f32 %v715, %v931
        %v962 = vadd.f32 %v720, %v936
        %v963 = vadd.f32 %v723, %v939
        %v964 = vadd.f32 %v728, %v944
        %v965 = vadd.f32 %v731, %v947
        %v966 = vld [vmem:[%s1 + $0x4] sm:$0xc]
        %v969 = vunpack.c.l.b16 %v213
        %v970 = vunpack.c.l.b16 %v214
        %v971 = vpack.c.b16 %v970, %v969
        %v973 = vunpack.c.l.b16 %v966
        %v974 = vpack.c.b16 %v973, %v973
        %v975 = vrot.slane %v974, 2
        %v977 = vsel %vm444, %v971, 0
        %v980 = vsel %vm469, %v975, 0
        %982 = vmatprep.subr.bf16.mxu0 0
        %983 = vmatpush1.bf16.msra.mxu0 %v980
        %984 = vmatprep.subr.bf16.mxu0 0
        %985 = vmatpush1.bf16.msra.mxu0 0
        %986 = vmatprep.subr.bf16.mxu0 0
        %987 = vmatpush1.bf16.msra.mxu0 0
        %988 = vmatprep.subr.bf16.mxu0 0
        %989 = vmatpush1.bf16.msra.mxu0 0
        %990 = vmatprep.subr.bf16.mxu0 0
        %991 = vmatpush1.bf16.msra.mxu0 0
        %992 = vmatprep.subr.bf16.mxu0 0
        %993 = vmatpush1.bf16.msra.mxu0 0
        %994 = vmatprep.subr.bf16.mxu0 0
        %995 = vmatpush1.bf16.msra.mxu0 0
        %996 = vmatprep.subr.bf16.mxu0 0
        %997 = vmatpush1.bf16.msra.mxu0 0
        %998 = vmatprep.subr.bf16.mxu0 0
        %999 = vmatpush1.bf16.msra.mxu0 0
        %1000 = vmatprep.subr.bf16.mxu0 0
        %1001 = vmatpush1.bf16.msra.mxu0 0
        %1002 = vmatprep.subr.bf16.mxu0 0
        %1003 = vmatpush1.bf16.msra.mxu0 0
        %1004 = vmatprep.subr.bf16.mxu0 0
        %1005 = vmatpush1.bf16.msra.mxu0 0
        %1006 = vmatprep.subr.bf16.mxu0 0
        %1007 = vmatpush1.bf16.msra.mxu0 0
        %1008 = vmatprep.subr.bf16.mxu0 0
        %1009 = vmatpush1.bf16.msra.mxu0 0
        %1010 = vmatprep.subr.bf16.mxu0 0
        %1011 = vmatpush1.bf16.msra.mxu0 0
        %1012 = vmatprep.subr.bf16.mxu0 0
        %1013 = vmatpush1.bf16.msra.mxu0 0
        %1014 = vmatprep.mubr.bf16.mxu0 0
        %1015 = vmatmul.mubr.bf16.gmra.mrb[0].mxu0 %v614
        %v1016 = vpop.f32.mrb[0].mxu0
        %v1017 = vadd.f32 0.0, %v1016
        %v1018 = vpop.f32.mrb[0].mxu0
        %v1019 = vpop.f32.mrb[0].mxu0
        %v1020 = vadd.f32 0.0, %v1019
        %v1021 = vpop.f32.mrb[0].mxu0
        %1022 = vmatprep.mubr.bf16.mxu0 0
        %1023 = vmatmul.mubr.bf16.gmra.mrb[0].mxu0 %v617
        %v1024 = vpop.f32.mrb[0].mxu0
        %v1025 = vadd.f32 0.0, %v1024
        %v1026 = vpop.f32.mrb[0].mxu0
        %v1027 = vpop.f32.mrb[0].mxu0
        %v1028 = vadd.f32 0.0, %v1027
        %v1029 = vpop.f32.mrb[0].mxu0
        %1030 = vmatprep.mubr.bf16.mxu0 0
        %1031 = vmatmul.mubr.bf16.gmra.mrb[0].mxu0 %v620
        %v1032 = vpop.f32.mrb[0].mxu0
        %v1033 = vadd.f32 0.0, %v1032
        %v1034 = vpop.f32.mrb[0].mxu0
        %v1035 = vpop.f32.mrb[0].mxu0
        %v1036 = vadd.f32 0.0, %v1035
        %v1037 = vpop.f32.mrb[0].mxu0
        %1038 = vmatprep.mubr.bf16.mxu0 0
        %1039 = vmatmul.mubr.bf16.gmra.mrb[0].mxu0 %v623
        %v1040 = vpop.f32.mrb[0].mxu0
        %v1041 = vadd.f32 0.0, %v1040
        %v1042 = vpop.f32.mrb[0].mxu0
        %v1043 = vpop.f32.mrb[0].mxu0
        %v1044 = vadd.f32 0.0, %v1043
        %v1045 = vpop.f32.mrb[0].mxu0
        %1046 = vmatprep.mubr.bf16.mxu0 0
        %1047 = vmatmul.mubr.bf16.gmra.mrb[0].mxu0 %v626
        %v1048 = vpop.f32.mrb[0].mxu0
        %v1049 = vadd.f32 0.0, %v1048
        %v1050 = vpop.f32.mrb[0].mxu0
        %v1051 = vpop.f32.mrb[0].mxu0
        %v1052 = vadd.f32 0.0, %v1051
        %v1053 = vpop.f32.mrb[0].mxu0
        %1054 = vmatprep.mubr.bf16.mxu0 0
        %1055 = vmatmul.mubr.bf16.gmra.mrb[0].mxu0 %v629
        %v1056 = vpop.f32.mrb[0].mxu0
        %v1057 = vadd.f32 0.0, %v1056
        %v1058 = vpop.f32.mrb[0].mxu0
        %v1059 = vpop.f32.mrb[0].mxu0
        %v1060 = vadd.f32 0.0, %v1059
        %v1061 = vpop.f32.mrb[0].mxu0
        %1062 = vmatprep.mubr.bf16.mxu0 0
        %1063 = vmatmul.mubr.bf16.gmra.mrb[0].mxu0 %v632
        %v1064 = vpop.f32.mrb[0].mxu0
        %v1065 = vadd.f32 0.0, %v1064
        %v1066 = vpop.f32.mrb[0].mxu0
        %v1067 = vpop.f32.mrb[0].mxu0
        %v1068 = vadd.f32 0.0, %v1067
        %v1069 = vpop.f32.mrb[0].mxu0
        %1070 = vmatprep.mubr.bf16.mxu0 0
        %1071 = vmatmul.mubr.bf16.gmra.mrb[0].mxu0 %v977
        %v1072 = vpop.f32.mrb[0].mxu0
        %v1073 = vadd.f32 0.0, %v1072
        %v1074 = vpop.f32.mrb[0].mxu0
        %v1075 = vpop.f32.mrb[0].mxu0
        %v1076 = vadd.f32 0.0, %v1075
        %v1077 = vpop.f32.mrb[0].mxu0
        %1078 = vdwg.mxu0
        %v1079 = vadd.f32 %v950, %v1017
        %v1080 = vadd.f32 %v951, %v1020
        %v1081 = vadd.f32 %v952, %v1025
        %v1082 = vadd.f32 %v953, %v1028
        %v1083 = vadd.f32 %v954, %v1033
        %v1084 = vadd.f32 %v955, %v1036
        %v1085 = vadd.f32 %v956, %v1041
        %v1086 = vadd.f32 %v957, %v1044
        %v1087 = vadd.f32 %v958, %v1049
        %v1088 = vadd.f32 %v959, %v1052
        %v1089 = vadd.f32 %v960, %v1057
        %v1090 = vadd.f32 %v961, %v1060
        %v1091 = vadd.f32 %v962, %v1065
        %v1092 = vadd.f32 %v963, %v1068
        %v1093 = vadd.f32 %v964, %v1073
        %v1094 = vadd.f32 %v965, %v1076
        %v1096 = vshrl.u32 %v213, 16
        %v1098 = vrot.slane %v1096, 4
        %v1099 = vshll.u32 %v213, 16
        %v1101 = vrot.slane %v1099, 5
        %v1102 = vor.u32 %v1098, %v1101
        %v1103 = vrot.slane %v1102, 4
        %v1105 = vshll.u32 %v214, 16
        %v1107 = vrot.slane %v1105, 5
        %v1108 = vsel %vm222, %v1103, %v1107
        %v1109 = vshrl.u32 %v214, 16
        %v1111 = vrot.slane %v1109, 4
        %v1112 = vor.u32 %v1111, %v1107
        %v1113 = vrot.slane %v1112, 4
        %v1115 = vshll.u32 %v215, 16
        %v1117 = vrot.slane %v1115, 5
        %v1118 = vsel %vm222, %v1113, %v1117
        %v1119 = vld [vmem:[%s1 + $0x8] sm:$0x3]
        %v1120 = vunpack.c.l.b16 %v1108
        %v1121 = vunpack.c.l.b16 %v1118
        %v1122 = vpack.c.b16 %v1121, %v1120
        %v1124 = vsel %vm444, %v1122, 0
        %v1127 = vsel %vm469, %v1119, 0
        %1129 = vmatprep.subr.bf16.mxu0 0
        %1130 = vmatpush1.bf16.msra.mxu0 %v1127
        %1131 = vmatprep.subr.bf16.mxu0 0
        %1132 = vmatpush1.bf16.msra.mxu0 0
        %1133 = vmatprep.subr.bf16.mxu0 0
        %1134 = vmatpush1.bf16.msra.mxu0 0
        %1135 = vmatprep.subr.bf16.mxu0 0
        %1136 = vmatpush1.bf16.msra.mxu0 0
        %1137 = vmatprep.subr.bf16.mxu0 0
        %1138 = vmatpush1.bf16.msra.mxu0 0
        %1139 = vmatprep.subr.bf16.mxu0 0
        %1140 = vmatpush1.bf16.msra.mxu0 0
        %1141 = vmatprep.subr.bf16.mxu0 0
        %1142 = vmatpush1.bf16.msra.mxu0 0
        %1143 = vmatprep.subr.bf16.mxu0 0
        %1144 = vmatpush1.bf16.msra.mxu0 0
        %1145 = vmatprep.subr.bf16.mxu0 0
        %1146 = vmatpush1.bf16.msra.mxu0 0
        %1147 = vmatprep.subr.bf16.mxu0 0
        %1148 = vmatpush1.bf16.msra.mxu0 0
        %1149 = vmatprep.subr.bf16.mxu0 0
        %1150 = vmatpush1.bf16.msra.mxu0 0
        %1151 = vmatprep.subr.bf16.mxu0 0
        %1152 = vmatpush1.bf16.msra.mxu0 0
        %1153 = vmatprep.subr.bf16.mxu0 0
        %1154 = vmatpush1.bf16.msra.mxu0 0
        %1155 = vmatprep.subr.bf16.mxu0 0
        %1156 = vmatpush1.bf16.msra.mxu0 0
        %1157 = vmatprep.subr.bf16.mxu0 0
        %1158 = vmatpush1.bf16.msra.mxu0 0
        %1159 = vmatprep.subr.bf16.mxu0 0
        %1160 = vmatpush1.bf16.msra.mxu0 0
        %1161 = vmatprep.mubr.bf16.mxu0 0
        %1162 = vmatmul.mubr.bf16.gmra.mrb[0].mxu0 %v449
        %v1163 = vpop.f32.mrb[0].mxu0
        %v1164 = vadd.f32 0.0, %v1163
        %v1165 = vpop.f32.mrb[0].mxu0
        %v1166 = vpop.f32.mrb[0].mxu0
        %v1167 = vadd.f32 0.0, %v1166
        %v1168 = vpop.f32.mrb[0].mxu0
        %1169 = vmatprep.mubr.bf16.mxu0 0
        %1170 = vmatmul.mubr.bf16.gmra.mrb[0].mxu0 %v452
        %v1171 = vpop.f32.mrb[0].mxu0
        %v1172 = vadd.f32 0.0, %v1171
        %v1173 = vpop.f32.mrb[0].mxu0
        %v1174 = vpop.f32.mrb[0].mxu0
        %v1175 = vadd.f32 0.0, %v1174
        %v1176 = vpop.f32.mrb[0].mxu0
        %1177 = vmatprep.mubr.bf16.mxu0 0
        %1178 = vmatmul.mubr.bf16.gmra.mrb[0].mxu0 %v455
        %v1179 = vpop.f32.mrb[0].mxu0
        %v1180 = vadd.f32 0.0, %v1179
        %v1181 = vpop.f32.mrb[0].mxu0
        %v1182 = vpop.f32.mrb[0].mxu0
        %v1183 = vadd.f32 0.0, %v1182
        %v1184 = vpop.f32.mrb[0].mxu0
        %1185 = vmatprep.mubr.bf16.mxu0 0
        %1186 = vmatmul.mubr.bf16.gmra.mrb[0].mxu0 %v458
        %v1187 = vpop.f32.mrb[0].mxu0
        %v1188 = vadd.f32 0.0, %v1187
        %v1189 = vpop.f32.mrb[0].mxu0
        %v1190 = vpop.f32.mrb[0].mxu0
        %v1191 = vadd.f32 0.0, %v1190
        %v1192 = vpop.f32.mrb[0].mxu0
        %1193 = vmatprep.mubr.bf16.mxu0 0
        %1194 = vmatmul.mubr.bf16.gmra.mrb[0].mxu0 %v461
        %v1195 = vpop.f32.mrb[0].mxu0
        %v1196 = vadd.f32 0.0, %v1195
        %v1197 = vpop.f32.mrb[0].mxu0
        %v1198 = vpop.f32.mrb[0].mxu0
        %v1199 = vadd.f32 0.0, %v1198
        %v1200 = vpop.f32.mrb[0].mxu0
        %1201 = vmatprep.mubr.bf16.mxu0 0
        %1202 = vmatmul.mubr.bf16.gmra.mrb[0].mxu0 %v464
        %v1203 = vpop.f32.mrb[0].mxu0
        %v1204 = vadd.f32 0.0, %v1203
        %v1205 = vpop.f32.mrb[0].mxu0
        %v1206 = vpop.f32.mrb[0].mxu0
        %v1207 = vadd.f32 0.0, %v1206
        %v1208 = vpop.f32.mrb[0].mxu0
        %1209 = vmatprep.mubr.bf16.mxu0 0
        %1210 = vmatmul.mubr.bf16.gmra.mrb[0].mxu0 %v467
        %v1211 = vpop.f32.mrb[0].mxu0
        %v1212 = vadd.f32 0.0, %v1211
        %v1213 = vpop.f32.mrb[0].mxu0
        %v1214 = vpop.f32.mrb[0].mxu0
        %v1215 = vadd.f32 0.0, %v1214
        %v1216 = vpop.f32.mrb[0].mxu0
        %1217 = vmatprep.mubr.bf16.mxu0 0
        %1218 = vmatmul.mubr.bf16.gmra.mrb[0].mxu0 %v1124
        %v1219 = vpop.f32.mrb[0].mxu0
        %v1220 = vadd.f32 0.0, %v1219
        %v1221 = vpop.f32.mrb[0].mxu0
        %v1222 = vpop.f32.mrb[0].mxu0
        %v1223 = vadd.f32 0.0, %v1222
        %v1224 = vpop.f32.mrb[0].mxu0
        %1225 = vdwg.mxu0
        %v1226 = vadd.f32 %v1079, %v1164
        %v1227 = vadd.f32 %v1080, %v1167
        %v1228 = vadd.f32 %v1081, %v1172
        %v1229 = vadd.f32 %v1082, %v1175
        %v1230 = vadd.f32 %v1083, %v1180
        %v1231 = vadd.f32 %v1084, %v1183
        %v1232 = vadd.f32 %v1085, %v1188
        %v1233 = vadd.f32 %v1086, %v1191
        %v1234 = vadd.f32 %v1087, %v1196
        %v1235 = vadd.f32 %v1088, %v1199
        %v1236 = vadd.f32 %v1089, %v1204
        %v1237 = vadd.f32 %v1090, %v1207
        %v1238 = vadd.f32 %v1091, %v1212
        %v1239 = vadd.f32 %v1092, %v1215
        %v1240 = vadd.f32 %v1093, %v1220
        %v1241 = vadd.f32 %v1094, %v1223
        %v1243 = vrot.slane %v213, 5
        %v1244 = vrot.slane %v1243, 4
        %v1245 = vrot.slane %v214, 5
        %v1246 = vsel %vm744, %v1244, %v1245
        %v1247 = vrot.slane %v1245, 4
        %v1248 = vrot.slane %v215, 5
        %v1249 = vsel %vm744, %v1247, %v1248
        %v1250 = vld [vmem:[%s1 + $0x8] sm:$0xc]
        %v1251 = vunpack.c.l.b16 %v1246
        %v1252 = vunpack.c.l.b16 %v1249
        %v1253 = vpack.c.b16 %v1252, %v1251
        %v1255 = vunpack.c.l.b16 %v1250
        %v1256 = vpack.c.b16 %v1255, %v1255
        %v1257 = vrot.slane %v1256, 2
        %v1259 = vsel %vm444, %v1253, 0
        %v1262 = vsel %vm469, %v1257, 0
        %1264 = vmatprep.subr.bf16.mxu0 0
        %1265 = vmatpush1.bf16.msra.mxu0 %v1262
        %1266 = vmatprep.subr.bf16.mxu0 0
        %1267 = vmatpush1.bf16.msra.mxu0 0
        %1268 = vmatprep.subr.bf16.mxu0 0
        %1269 = vmatpush1.bf16.msra.mxu0 0
        %1270 = vmatprep.subr.bf16.mxu0 0
        %1271 = vmatpush1.bf16.msra.mxu0 0
        %1272 = vmatprep.subr.bf16.mxu0 0
        %1273 = vmatpush1.bf16.msra.mxu0 0
        %1274 = vmatprep.subr.bf16.mxu0 0
        %1275 = vmatpush1.bf16.msra.mxu0 0
        %1276 = vmatprep.subr.bf16.mxu0 0
        %1277 = vmatpush1.bf16.msra.mxu0 0
        %1278 = vmatprep.subr.bf16.mxu0 0
        %1279 = vmatpush1.bf16.msra.mxu0 0
        %1280 = vmatprep.subr.bf16.mxu0 0
        %1281 = vmatpush1.bf16.msra.mxu0 0
        %1282 = vmatprep.subr.bf16.mxu0 0
        %1283 = vmatpush1.bf16.msra.mxu0 0
        %1284 = vmatprep.subr.bf16.mxu0 0
        %1285 = vmatpush1.bf16.msra.mxu0 0
        %1286 = vmatprep.subr.bf16.mxu0 0
        %1287 = vmatpush1.bf16.msra.mxu0 0
        %1288 = vmatprep.subr.bf16.mxu0 0
        %1289 = vmatpush1.bf16.msra.mxu0 0
        %1290 = vmatprep.subr.bf16.mxu0 0
        %1291 = vmatpush1.bf16.msra.mxu0 0
        %1292 = vmatprep.subr.bf16.mxu0 0
        %1293 = vmatpush1.bf16.msra.mxu0 0
        %1294 = vmatprep.subr.bf16.mxu0 0
        %1295 = vmatpush1.bf16.msra.mxu0 0
        %1296 = vmatprep.mubr.bf16.mxu0 0
        %1297 = vmatmul.mubr.bf16.gmra.mrb[0].mxu0 %v830
        %v1298 = vpop.f32.mrb[0].mxu0
        %v1299 = vadd.f32 0.0, %v1298
        %v1300 = vpop.f32.mrb[0].mxu0
        %v1301 = vpop.f32.mrb[0].mxu0
        %v1302 = vadd.f32 0.0, %v1301
        %v1303 = vpop.f32.mrb[0].mxu0
        %1304 = vmatprep.mubr.bf16.mxu0 0
        %1305 = vmatmul.mubr.bf16.gmra.mrb[0].mxu0 %v833
        %v1306 = vpop.f32.mrb[0].mxu0
        %v1307 = vadd.f32 0.0, %v1306
        %v1308 = vpop.f32.mrb[0].mxu0
        %v1309 = vpop.f32.mrb[0].mxu0
        %v1310 = vadd.f32 0.0, %v1309
        %v1311 = vpop.f32.mrb[0].mxu0
        %1312 = vmatprep.mubr.bf16.mxu0 0
        %1313 = vmatmul.mubr.bf16.gmra.mrb[0].mxu0 %v836
        %v1314 = vpop.f32.mrb[0].mxu0
        %v1315 = vadd.f32 0.0, %v1314
        %v1316 = vpop.f32.mrb[0].mxu0
        %v1317 = vpop.f32.mrb[0].mxu0
        %v1318 = vadd.f32 0.0, %v1317
        %v1319 = vpop.f32.mrb[0].mxu0
        %1320 = vmatprep.mubr.bf16.mxu0 0
        %1321 = vmatmul.mubr.bf16.gmra.mrb[0].mxu0 %v839
        %v1322 = vpop.f32.mrb[0].mxu0
        %v1323 = vadd.f32 0.0, %v1322
        %v1324 = vpop.f32.mrb[0].mxu0
        %v1325 = vpop.f32.mrb[0].mxu0
        %v1326 = vadd.f32 0.0, %v1325
        %v1327 = vpop.f32.mrb[0].mxu0
        %1328 = vmatprep.mubr.bf16.mxu0 0
        %1329 = vmatmul.mubr.bf16.gmra.mrb[0].mxu0 %v842
        %v1330 = vpop.f32.mrb[0].mxu0
        %v1331 = vadd.f32 0.0, %v1330
        %v1332 = vpop.f32.mrb[0].mxu0
        %v1333 = vpop.f32.mrb[0].mxu0
        %v1334 = vadd.f32 0.0, %v1333
        %v1335 = vpop.f32.mrb[0].mxu0
        %1336 = vmatprep.mubr.bf16.mxu0 0
        %1337 = vmatmul.mubr.bf16.gmra.mrb[0].mxu0 %v845
        %v1338 = vpop.f32.mrb[0].mxu0
        %v1339 = vadd.f32 0.0, %v1338
        %v1340 = vpop.f32.mrb[0].mxu0
        %v1341 = vpop.f32.mrb[0].mxu0
        %v1342 = vadd.f32 0.0, %v1341
        %v1343 = vpop.f32.mrb[0].mxu0
        %1344 = vmatprep.mubr.bf16.mxu0 0
        %1345 = vmatmul.mubr.bf16.gmra.mrb[0].mxu0 %v848
        %v1346 = vpop.f32.mrb[0].mxu0
        %v1347 = vadd.f32 0.0, %v1346
        %v1348 = vpop.f32.mrb[0].mxu0
        %v1349 = vpop.f32.mrb[0].mxu0
        %v1350 = vadd.f32 0.0, %v1349
        %v1351 = vpop.f32.mrb[0].mxu0
        %1352 = vmatprep.mubr.bf16.mxu0 0
        %1353 = vmatmul.mubr.bf16.gmra.mrb[0].mxu0 %v1259
        %v1354 = vpop.f32.mrb[0].mxu0
        %v1355 = vadd.f32 0.0, %v1354
        %v1356 = vpop.f32.mrb[0].mxu0
        %v1357 = vpop.f32.mrb[0].mxu0
        %v1358 = vadd.f32 0.0, %v1357
        %v1359 = vpop.f32.mrb[0].mxu0
        %1360 = vdwg.mxu0
        %v1361 = vadd.f32 %v1226, %v1299
        %v1362 = vadd.f32 %v1227, %v1302
        %v1363 = vadd.f32 %v1228, %v1307
        %v1364 = vadd.f32 %v1229, %v1310
        %v1365 = vadd.f32 %v1230, %v1315
        %v1366 = vadd.f32 %v1231, %v1318
        %v1367 = vadd.f32 %v1232, %v1323
        %v1368 = vadd.f32 %v1233, %v1326
        %v1369 = vadd.f32 %v1234, %v1331
        %v1370 = vadd.f32 %v1235, %v1334
        %v1371 = vadd.f32 %v1236, %v1339
        %v1372 = vadd.f32 %v1237, %v1342
        %v1373 = vadd.f32 %v1238, %v1347
        %v1374 = vadd.f32 %v1239, %v1350
        %v1375 = vadd.f32 %v1240, %v1355
        %v1376 = vadd.f32 %v1241, %v1358
        %v1377 = vld [vmem:[%s1 + $0xc] sm:$0x3]
        %v1380 = vunpack.c.l.b16 %v216
        %v1381 = vunpack.c.l.b16 %v217
        %v1382 = vpack.c.b16 %v1381, %v1380
        %v1384 = vsel %vm444, %v1382, 0
        %v1387 = vsel %vm469, %v1377, 0
        %1389 = vmatprep.subr.bf16.mxu0 0
        %1390 = vmatpush1.bf16.msra.mxu0 %v1387
        %1391 = vmatprep.subr.bf16.mxu0 0
        %1392 = vmatpush1.bf16.msra.mxu0 0
        %1393 = vmatprep.subr.bf16.mxu0 0
        %1394 = vmatpush1.bf16.msra.mxu0 0
        %1395 = vmatprep.subr.bf16.mxu0 0
        %1396 = vmatpush1.bf16.msra.mxu0 0
        %1397 = vmatprep.subr.bf16.mxu0 0
        %1398 = vmatpush1.bf16.msra.mxu0 0
        %1399 = vmatprep.subr.bf16.mxu0 0
        %1400 = vmatpush1.bf16.msra.mxu0 0
        %1401 = vmatprep.subr.bf16.mxu0 0
        %1402 = vmatpush1.bf16.msra.mxu0 0
        %1403 = vmatprep.subr.bf16.mxu0 0
        %1404 = vmatpush1.bf16.msra.mxu0 0
        %1405 = vmatprep.subr.bf16.mxu0 0
        %1406 = vmatpush1.bf16.msra.mxu0 0
        %1407 = vmatprep.subr.bf16.mxu0 0
        %1408 = vmatpush1.bf16.msra.mxu0 0
        %1409 = vmatprep.subr.bf16.mxu0 0
        %1410 = vmatpush1.bf16.msra.mxu0 0
        %1411 = vmatprep.subr.bf16.mxu0 0
        %1412 = vmatpush1.bf16.msra.mxu0 0
        %1413 = vmatprep.subr.bf16.mxu0 0
        %1414 = vmatpush1.bf16.msra.mxu0 0
        %1415 = vmatprep.subr.bf16.mxu0 0
        %1416 = vmatpush1.bf16.msra.mxu0 0
        %1417 = vmatprep.subr.bf16.mxu0 0
        %1418 = vmatpush1.bf16.msra.mxu0 0
        %1419 = vmatprep.subr.bf16.mxu0 0
        %1420 = vmatpush1.bf16.msra.mxu0 0
        %1421 = vmatprep.mubr.bf16.mxu0 0
        %1422 = vmatmul.mubr.bf16.gmra.mrb[0].mxu0 %v617
        %v1423 = vpop.f32.mrb[0].mxu0
        %v1424 = vadd.f32 0.0, %v1423
        %v1425 = vpop.f32.mrb[0].mxu0
        %v1426 = vpop.f32.mrb[0].mxu0
        %v1427 = vadd.f32 0.0, %v1426
        %v1428 = vpop.f32.mrb[0].mxu0
        %1429 = vmatprep.mubr.bf16.mxu0 0
        %1430 = vmatmul.mubr.bf16.gmra.mrb[0].mxu0 %v620
        %v1431 = vpop.f32.mrb[0].mxu0
        %v1432 = vadd.f32 0.0, %v1431
        %v1433 = vpop.f32.mrb[0].mxu0
        %v1434 = vpop.f32.mrb[0].mxu0
        %v1435 = vadd.f32 0.0, %v1434
        %v1436 = vpop.f32.mrb[0].mxu0
        %1437 = vmatprep.mubr.bf16.mxu0 0
        %1438 = vmatmul.mubr.bf16.gmra.mrb[0].mxu0 %v623
        %v1439 = vpop.f32.mrb[0].mxu0
        %v1440 = vadd.f32 0.0, %v1439
        %v1441 = vpop.f32.mrb[0].mxu0
        %v1442 = vpop.f32.mrb[0].mxu0
        %v1443 = vadd.f32 0.0, %v1442
        %v1444 = vpop.f32.mrb[0].mxu0
        %1445 = vmatprep.mubr.bf16.mxu0 0
        %1446 = vmatmul.mubr.bf16.gmra.mrb[0].mxu0 %v626
        %v1447 = vpop.f32.mrb[0].mxu0
        %v1448 = vadd.f32 0.0, %v1447
        %v1449 = vpop.f32.mrb[0].mxu0
        %v1450 = vpop.f32.mrb[0].mxu0
        %v1451 = vadd.f32 0.0, %v1450
        %v1452 = vpop.f32.mrb[0].mxu0
        %1453 = vmatprep.mubr.bf16.mxu0 0
        %1454 = vmatmul.mubr.bf16.gmra.mrb[0].mxu0 %v629
        %v1455 = vpop.f32.mrb[0].mxu0
        %v1456 = vadd.f32 0.0, %v1455
        %v1457 = vpop.f32.mrb[0].mxu0
        %v1458 = vpop.f32.mrb[0].mxu0
        %v1459 = vadd.f32 0.0, %v1458
        %v1460 = vpop.f32.mrb[0].mxu0
        %1461 = vmatprep.mubr.bf16.mxu0 0
        %1462 = vmatmul.mubr.bf16.gmra.mrb[0].mxu0 %v632
        %v1463 = vpop.f32.mrb[0].mxu0
        %v1464 = vadd.f32 0.0, %v1463
        %v1465 = vpop.f32.mrb[0].mxu0
        %v1466 = vpop.f32.mrb[0].mxu0
        %v1467 = vadd.f32 0.0, %v1466
        %v1468 = vpop.f32.mrb[0].mxu0
        %1469 = vmatprep.mubr.bf16.mxu0 0
        %1470 = vmatmul.mubr.bf16.gmra.mrb[0].mxu0 %v977
        %v1471 = vpop.f32.mrb[0].mxu0
        %v1472 = vadd.f32 0.0, %v1471
        %v1473 = vpop.f32.mrb[0].mxu0
        %v1474 = vpop.f32.mrb[0].mxu0
        %v1475 = vadd.f32 0.0, %v1474
        %v1476 = vpop.f32.mrb[0].mxu0
        %1477 = vmatprep.mubr.bf16.mxu0 0
        %1478 = vmatmul.mubr.bf16.gmra.mrb[0].mxu0 %v1384
        %v1479 = vpop.f32.mrb[0].mxu0
        %v1480 = vadd.f32 0.0, %v1479
        %v1481 = vpop.f32.mrb[0].mxu0
        %v1482 = vpop.f32.mrb[0].mxu0
        %v1483 = vadd.f32 0.0, %v1482
        %v1484 = vpop.f32.mrb[0].mxu0
        %1485 = vdwg.mxu0
        %v1486 = vadd.f32 %v1361, %v1424
        %v1487 = vadd.f32 %v1362, %v1427
        %v1488 = vadd.f32 %v1363, %v1432
        %v1489 = vadd.f32 %v1364, %v1435
        %v1490 = vadd.f32 %v1365, %v1440
        %v1491 = vadd.f32 %v1366, %v1443
        %v1492 = vadd.f32 %v1367, %v1448
        %v1493 = vadd.f32 %v1368, %v1451
        %v1494 = vadd.f32 %v1369, %v1456
        %v1495 = vadd.f32 %v1370, %v1459
        %v1496 = vadd.f32 %v1371, %v1464
        %v1497 = vadd.f32 %v1372, %v1467
        %v1498 = vadd.f32 %v1373, %v1472
        %v1499 = vadd.f32 %v1374, %v1475
        %v1500 = vadd.f32 %v1375, %v1480
        %v1501 = vadd.f32 %v1376, %v1483
        %v1503 = vshrl.u32 %v216, 16
        %v1505 = vrot.slane %v1503, 4
        %v1506 = vshll.u32 %v216, 16
        %v1508 = vrot.slane %v1506, 5
        %v1509 = vor.u32 %v1505, %v1508
        %v1510 = vrot.slane %v1509, 4
        %v1512 = vshll.u32 %v217, 16
        %v1514 = vrot.slane %v1512, 5
        %v1515 = vsel %vm222, %v1510, %v1514
        %v1516 = vshrl.u32 %v217, 16
        %v1518 = vrot.slane %v1516, 4
        %v1519 = vor.u32 %v1518, %v1514
        %v1520 = vrot.slane %v1519, 4
        %v1522 = vshll.u32 %v218, 16
        %v1524 = vrot.slane %v1522, 5
        %v1525 = vsel %vm222, %v1520, %v1524
        %v1526 = vld [vmem:[%s1 + $0xc] sm:$0xc]
        %v1527 = vunpack.c.l.b16 %v1515
        %v1528 = vunpack.c.l.b16 %v1525
        %v1529 = vpack.c.b16 %v1528, %v1527
        %v1531 = vunpack.c.l.b16 %v1526
        %v1532 = vpack.c.b16 %v1531, %v1531
        %v1533 = vrot.slane %v1532, 2
        %v1535 = vsel %vm444, %v1529, 0
        %v1538 = vsel %vm469, %v1533, 0
        %1540 = vmatprep.subr.bf16.mxu0 0
        %1541 = vmatpush1.bf16.msra.mxu0 %v1538
        %1542 = vmatprep.subr.bf16.mxu0 0
        %1543 = vmatpush1.bf16.msra.mxu0 0
        %1544 = vmatprep.subr.bf16.mxu0 0
        %1545 = vmatpush1.bf16.msra.mxu0 0
        %1546 = vmatprep.subr.bf16.mxu0 0
        %1547 = vmatpush1.bf16.msra.mxu0 0
        %1548 = vmatprep.subr.bf16.mxu0 0
        %1549 = vmatpush1.bf16.msra.mxu0 0
        %1550 = vmatprep.subr.bf16.mxu0 0
        %1551 = vmatpush1.bf16.msra.mxu0 0
        %1552 = vmatprep.subr.bf16.mxu0 0
        %1553 = vmatpush1.bf16.msra.mxu0 0
        %1554 = vmatprep.subr.bf16.mxu0 0
        %1555 = vmatpush1.bf16.msra.mxu0 0
        %1556 = vmatprep.subr.bf16.mxu0 0
        %1557 = vmatpush1.bf16.msra.mxu0 0
        %1558 = vmatprep.subr.bf16.mxu0 0
        %1559 = vmatpush1.bf16.msra.mxu0 0
        %1560 = vmatprep.subr.bf16.mxu0 0
        %1561 = vmatpush1.bf16.msra.mxu0 0
        %1562 = vmatprep.subr.bf16.mxu0 0
        %1563 = vmatpush1.bf16.msra.mxu0 0
        %1564 = vmatprep.subr.bf16.mxu0 0
        %1565 = vmatpush1.bf16.msra.mxu0 0
        %1566 = vmatprep.subr.bf16.mxu0 0
        %1567 = vmatpush1.bf16.msra.mxu0 0
        %1568 = vmatprep.subr.bf16.mxu0 0
        %1569 = vmatpush1.bf16.msra.mxu0 0
        %1570 = vmatprep.subr.bf16.mxu0 0
        %1571 = vmatpush1.bf16.msra.mxu0 0
        %1572 = vmatprep.mubr.bf16.mxu0 0
        %1573 = vmatmul.mubr.bf16.gmra.mrb[0].mxu0 %v452
        %v1574 = vpop.f32.mrb[0].mxu0
        %v1575 = vadd.f32 0.0, %v1574
        %v1576 = vpop.f32.mrb[0].mxu0
        %v1577 = vpop.f32.mrb[0].mxu0
        %v1578 = vadd.f32 0.0, %v1577
        %v1579 = vpop.f32.mrb[0].mxu0
        %1580 = vmatprep.mubr.bf16.mxu0 0
        %1581 = vmatmul.mubr.bf16.gmra.mrb[0].mxu0 %v455
        %v1582 = vpop.f32.mrb[0].mxu0
        %v1583 = vadd.f32 0.0, %v1582
        %v1584 = vpop.f32.mrb[0].mxu0
        %v1585 = vpop.f32.mrb[0].mxu0
        %v1586 = vadd.f32 0.0, %v1585
        %v1587 = vpop.f32.mrb[0].mxu0
        %1588 = vmatprep.mubr.bf16.mxu0 0
        %1589 = vmatmul.mubr.bf16.gmra.mrb[0].mxu0 %v458
        %v1590 = vpop.f32.mrb[0].mxu0
        %v1591 = vadd.f32 0.0, %v1590
        %v1592 = vpop.f32.mrb[0].mxu0
        %v1593 = vpop.f32.mrb[0].mxu0
        %v1594 = vadd.f32 0.0, %v1593
        %v1595 = vpop.f32.mrb[0].mxu0
        %1596 = vmatprep.mubr.bf16.mxu0 0
        %1597 = vmatmul.mubr.bf16.gmra.mrb[0].mxu0 %v461
        %v1598 = vpop.f32.mrb[0].mxu0
        %v1599 = vadd.f32 0.0, %v1598
        %v1600 = vpop.f32.mrb[0].mxu0
        %v1601 = vpop.f32.mrb[0].mxu0
        %v1602 = vadd.f32 0.0, %v1601
        %v1603 = vpop.f32.mrb[0].mxu0
        %1604 = vmatprep.mubr.bf16.mxu0 0
        %1605 = vmatmul.mubr.bf16.gmra.mrb[0].mxu0 %v464
        %v1606 = vpop.f32.mrb[0].mxu0
        %v1607 = vadd.f32 0.0, %v1606
        %v1608 = vpop.f32.mrb[0].mxu0
        %v1609 = vpop.f32.mrb[0].mxu0
        %v1610 = vadd.f32 0.0, %v1609
        %v1611 = vpop.f32.mrb[0].mxu0
        %1612 = vmatprep.mubr.bf16.mxu0 0
        %1613 = vmatmul.mubr.bf16.gmra.mrb[0].mxu0 %v467
        %v1614 = vpop.f32.mrb[0].mxu0
        %v1615 = vadd.f32 0.0, %v1614
        %v1616 = vpop.f32.mrb[0].mxu0
        %v1617 = vpop.f32.mrb[0].mxu0
        %v1618 = vadd.f32 0.0, %v1617
        %v1619 = vpop.f32.mrb[0].mxu0
        %1620 = vmatprep.mubr.bf16.mxu0 0
        %1621 = vmatmul.mubr.bf16.gmra.mrb[0].mxu0 %v1124
        %v1622 = vpop.f32.mrb[0].mxu0
        %v1623 = vadd.f32 0.0, %v1622
        %v1624 = vpop.f32.mrb[0].mxu0
        %v1625 = vpop.f32.mrb[0].mxu0
        %v1626 = vadd.f32 0.0, %v1625
        %v1627 = vpop.f32.mrb[0].mxu0
        %1628 = vmatprep.mubr.bf16.mxu0 0
        %1629 = vmatmul.mubr.bf16.gmra.mrb[0].mxu0 %v1535
        %v1630 = vpop.f32.mrb[0].mxu0
        %v1631 = vadd.f32 0.0, %v1630
        %v1632 = vpop.f32.mrb[0].mxu0
        %v1633 = vpop.f32.mrb[0].mxu0
        %v1634 = vadd.f32 0.0, %v1633
        %v1635 = vpop.f32.mrb[0].mxu0
        %1636 = vdwg.mxu0
        %v1637 = vadd.f32 %v1486, %v1575
        %v1638 = vadd.f32 %v1487, %v1578
        %v1639 = vadd.f32 %v1488, %v1583
        %v1640 = vadd.f32 %v1489, %v1586
        %v1641 = vadd.f32 %v1490, %v1591
        %v1642 = vadd.f32 %v1491, %v1594
        %v1643 = vadd.f32 %v1492, %v1599
        %v1644 = vadd.f32 %v1493, %v1602
        %v1645 = vadd.f32 %v1494, %v1607
        %v1646 = vadd.f32 %v1495, %v1610
        %v1647 = vadd.f32 %v1496, %v1615
        %v1648 = vadd.f32 %v1497, %v1618
        %v1649 = vadd.f32 %v1498, %v1623
        %v1650 = vadd.f32 %v1499, %v1626
        %v1651 = vadd.f32 %v1500, %v1631
        %v1652 = vadd.f32 %v1501, %v1634
        %v1654 = vrot.slane %v216, 5
        %v1655 = vrot.slane %v1654, 4
        %v1656 = vrot.slane %v217, 5
        %v1657 = vsel %vm744, %v1655, %v1656
        %v1658 = vrot.slane %v1656, 4
        %v1659 = vrot.slane %v218, 5
        %v1660 = vsel %vm744, %v1658, %v1659
        %v1661 = vld [vmem:[%s1 + $0x10] sm:$0x3]
        %v1662 = vunpack.c.l.b16 %v1657
        %v1663 = vunpack.c.l.b16 %v1660
        %v1664 = vpack.c.b16 %v1663, %v1662
        %v1666 = vsel %vm444, %v1664, 0
        %v1669 = vsel %vm469, %v1661, 0
        %1671 = vmatprep.subr.bf16.mxu0 0
        %1672 = vmatpush1.bf16.msra.mxu0 %v1669
        %1673 = vmatprep.subr.bf16.mxu0 0
        %1674 = vmatpush1.bf16.msra.mxu0 0
        %1675 = vmatprep.subr.bf16.mxu0 0
        %1676 = vmatpush1.bf16.msra.mxu0 0
        %1677 = vmatprep.subr.bf16.mxu0 0
        %1678 = vmatpush1.bf16.msra.mxu0 0
        %1679 = vmatprep.subr.bf16.mxu0 0
        %1680 = vmatpush1.bf16.msra.mxu0 0
        %1681 = vmatprep.subr.bf16.mxu0 0
        %1682 = vmatpush1.bf16.msra.mxu0 0
        %1683 = vmatprep.subr.bf16.mxu0 0
        %1684 = vmatpush1.bf16.msra.mxu0 0
        %1685 = vmatprep.subr.bf16.mxu0 0
        %1686 = vmatpush1.bf16.msra.mxu0 0
        %1687 = vmatprep.subr.bf16.mxu0 0
        %1688 = vmatpush1.bf16.msra.mxu0 0
        %1689 = vmatprep.subr.bf16.mxu0 0
        %1690 = vmatpush1.bf16.msra.mxu0 0
        %1691 = vmatprep.subr.bf16.mxu0 0
        %1692 = vmatpush1.bf16.msra.mxu0 0
        %1693 = vmatprep.subr.bf16.mxu0 0
        %1694 = vmatpush1.bf16.msra.mxu0 0
        %1695 = vmatprep.subr.bf16.mxu0 0
        %1696 = vmatpush1.bf16.msra.mxu0 0
        %1697 = vmatprep.subr.bf16.mxu0 0
        %1698 = vmatpush1.bf16.msra.mxu0 0
        %1699 = vmatprep.subr.bf16.mxu0 0
        %1700 = vmatpush1.bf16.msra.mxu0 0
        %1701 = vmatprep.subr.bf16.mxu0 0
        %1702 = vmatpush1.bf16.msra.mxu0 0
        %1703 = vmatprep.mubr.bf16.mxu0 0
        %1704 = vmatmul.mubr.bf16.gmra.mrb[0].mxu0 %v833
        %v1705 = vpop.f32.mrb[0].mxu0
        %v1706 = vadd.f32 0.0, %v1705
        %v1707 = vpop.f32.mrb[0].mxu0
        %v1708 = vpop.f32.mrb[0].mxu0
        %v1709 = vadd.f32 0.0, %v1708
        %v1710 = vpop.f32.mrb[0].mxu0
        %1711 = vmatprep.mubr.bf16.mxu0 0
        %1712 = vmatmul.mubr.bf16.gmra.mrb[0].mxu0 %v836
        %v1713 = vpop.f32.mrb[0].mxu0
        %v1714 = vadd.f32 0.0, %v1713
        %v1715 = vpop.f32.mrb[0].mxu0
        %v1716 = vpop.f32.mrb[0].mxu0
        %v1717 = vadd.f32 0.0, %v1716
        %v1718 = vpop.f32.mrb[0].mxu0
        %1719 = vmatprep.mubr.bf16.mxu0 0
        %1720 = vmatmul.mubr.bf16.gmra.mrb[0].mxu0 %v839
        %v1721 = vpop.f32.mrb[0].mxu0
        %v1722 = vadd.f32 0.0, %v1721
        %v1723 = vpop.f32.mrb[0].mxu0
        %v1724 = vpop.f32.mrb[0].mxu0
        %v1725 = vadd.f32 0.0, %v1724
        %v1726 = vpop.f32.mrb[0].mxu0
        %1727 = vmatprep.mubr.bf16.mxu0 0
        %1728 = vmatmul.mubr.bf16.gmra.mrb[0].mxu0 %v842
        %v1729 = vpop.f32.mrb[0].mxu0
        %v1730 = vadd.f32 0.0, %v1729
        %v1731 = vpop.f32.mrb[0].mxu0
        %v1732 = vpop.f32.mrb[0].mxu0
        %v1733 = vadd.f32 0.0, %v1732
        %v1734 = vpop.f32.mrb[0].mxu0
        %1735 = vmatprep.mubr.bf16.mxu0 0
        %1736 = vmatmul.mubr.bf16.gmra.mrb[0].mxu0 %v845
        %v1737 = vpop.f32.mrb[0].mxu0
        %v1738 = vadd.f32 0.0, %v1737
        %v1739 = vpop.f32.mrb[0].mxu0
        %v1740 = vpop.f32.mrb[0].mxu0
        %v1741 = vadd.f32 0.0, %v1740
        %v1742 = vpop.f32.mrb[0].mxu0
        %1743 = vmatprep.mubr.bf16.mxu0 0
        %1744 = vmatmul.mubr.bf16.gmra.mrb[0].mxu0 %v848
        %v1745 = vpop.f32.mrb[0].mxu0
        %v1746 = vadd.f32 0.0, %v1745
        %v1747 = vpop.f32.mrb[0].mxu0
        %v1748 = vpop.f32.mrb[0].mxu0
        %v1749 = vadd.f32 0.0, %v1748
        %v1750 = vpop.f32.mrb[0].mxu0
        %1751 = vmatprep.mubr.bf16.mxu0 0
        %1752 = vmatmul.mubr.bf16.gmra.mrb[0].mxu0 %v1259
        %v1753 = vpop.f32.mrb[0].mxu0
        %v1754 = vadd.f32 0.0, %v1753
        %v1755 = vpop.f32.mrb[0].mxu0
        %v1756 = vpop.f32.mrb[0].mxu0
        %v1757 = vadd.f32 0.0, %v1756
        %v1758 = vpop.f32.mrb[0].mxu0
        %1759 = vmatprep.mubr.bf16.mxu0 0
        %1760 = vmatmul.mubr.bf16.gmra.mrb[0].mxu0 %v1666
        %v1761 = vpop.f32.mrb[0].mxu0
        %v1762 = vadd.f32 0.0, %v1761
        %v1763 = vpop.f32.mrb[0].mxu0
        %v1764 = vpop.f32.mrb[0].mxu0
        %v1765 = vadd.f32 0.0, %v1764
        %v1766 = vpop.f32.mrb[0].mxu0
        %1767 = vdwg.mxu0
        %v1768 = vadd.f32 %v1637, %v1706
        %v1769 = vadd.f32 %v1638, %v1709
        %v1770 = vadd.f32 %v1639, %v1714
        %v1771 = vadd.f32 %v1640, %v1717
        %v1772 = vadd.f32 %v1641, %v1722
        %v1773 = vadd.f32 %v1642, %v1725
        %v1774 = vadd.f32 %v1643, %v1730
        %v1775 = vadd.f32 %v1644, %v1733
        %v1776 = vadd.f32 %v1645, %v1738
        %v1777 = vadd.f32 %v1646, %v1741
        %v1778 = vadd.f32 %v1647, %v1746
        %v1779 = vadd.f32 %v1648, %v1749
        %v1780 = vadd.f32 %v1649, %v1754
        %v1781 = vadd.f32 %v1650, %v1757
        %v1782 = vadd.f32 %v1651, %v1762
        %v1783 = vadd.f32 %v1652, %v1765
        %v1784 = vld [vmem:[%s2] sm:$0x1]
        %v1786 = vlaneseq
        %v1787 = vshrl.u32 %v1786, 7
        %v1788 = vsub.s32 0, %v1787
        %v1789 = vrot.slane %v1784, %v1788
        %v1791 = vadd.f32 %v1768, %v1789
        %v1792 = vadd.f32 %v1769, %v1789
        %v1793 = vadd.f32 %v1770, %v1789
        %v1794 = vadd.f32 %v1771, %v1789
        %v1795 = vadd.f32 %v1772, %v1789
        %v1796 = vadd.f32 %v1773, %v1789
        %v1797 = vadd.f32 %v1774, %v1789
        %v1798 = vadd.f32 %v1775, %v1789
        %v1799 = vadd.f32 %v1776, %v1789
        %v1800 = vadd.f32 %v1777, %v1789
        %v1801 = vadd.f32 %v1778, %v1789
        %v1802 = vadd.f32 %v1779, %v1789
        %v1803 = vadd.f32 %v1780, %v1789
        %v1804 = vadd.f32 %v1781, %v1789
        %v1805 = vadd.f32 %v1782, %v1789
        %v1806 = vadd.f32 %v1783, %v1789
        %v1807 = vmax.f32 %v1791, 0.0
        %v1808 = vmax.f32 %v1792, 0.0
        %v1809 = vmax.f32 %v1793, 0.0
        %v1810 = vmax.f32 %v1794, 0.0
        %v1811 = vmax.f32 %v1795, 0.0
        %v1812 = vmax.f32 %v1796, 0.0
        %v1813 = vmax.f32 %v1797, 0.0
        %v1814 = vmax.f32 %v1798, 0.0
        %v1815 = vmax.f32 %v1799, 0.0
        %v1816 = vmax.f32 %v1800, 0.0
        %v1817 = vmax.f32 %v1801, 0.0
        %v1818 = vmax.f32 %v1802, 0.0
        %v1819 = vmax.f32 %v1803, 0.0
        %v1820 = vmax.f32 %v1804, 0.0
        %v1821 = vmax.f32 %v1805, 0.0
        %v1822 = vmax.f32 %v1806, 0.0
        %v1823 = vpack.c.bf16 %v1808, %v1807
        %v1824 = vpack.c.bf16 %v1810, %v1809
        %v1825 = vpack.c.bf16 %v1812, %v1811
        %v1826 = vpack.c.bf16 %v1814, %v1813
        %v1827 = vpack.c.bf16 %v1816, %v1815
        %v1828 = vpack.c.bf16 %v1818, %v1817
        %v1829 = vpack.c.bf16 %v1820, %v1819
        %v1830 = vpack.c.bf16 %v1822, %v1821
        %v1839 = vunpack.c.l.b16 %v1823
        %v1840 = vunpack.c.h.b16 %v1823
        %v1841 = vunpack.c.l.b16 %v1824
        %v1842 = vunpack.c.h.b16 %v1824
        %v1843 = vunpack.c.l.b16 %v1825
        %v1844 = vunpack.c.h.b16 %v1825
        %v1845 = vunpack.c.l.b16 %v1826
        %v1846 = vunpack.c.h.b16 %v1826
        %v1847 = vunpack.c.l.b16 %v1827
        %v1848 = vunpack.c.h.b16 %v1827
        %v1849 = vunpack.c.l.b16 %v1828
        %v1850 = vunpack.c.h.b16 %v1828
        %v1851 = vunpack.c.l.b16 %v1829
        %v1852 = vunpack.c.h.b16 %v1829
        %v1853 = vunpack.c.l.b16 %v1830
        %v1854 = vunpack.c.h.b16 %v1830
        %v1855 = vpack.c.b16 %v1839, %v1839
        %v1856 = vpack.c.b16 %v1840, %v1840
        %v1857 = vpack.c.b16 %v1841, %v1841
        %v1858 = vpack.c.b16 %v1842, %v1842
        %v1859 = vpack.c.b16 %v1843, %v1843
        %v1860 = vpack.c.b16 %v1844, %v1844
        %v1861 = vpack.c.b16 %v1845, %v1845
        %v1862 = vpack.c.b16 %v1846, %v1846
        %v1863 = vpack.c.b16 %v1847, %v1847
        %v1864 = vpack.c.b16 %v1848, %v1848
        %v1865 = vpack.c.b16 %v1849, %v1849
        %v1866 = vpack.c.b16 %v1850, %v1850
        %v1867 = vpack.c.b16 %v1851, %v1851
        %v1868 = vpack.c.b16 %v1852, %v1852
        %v1869 = vpack.c.b16 %v1853, %v1853
        %v1870 = vpack.c.b16 %v1854, %v1854
        %1887 = vst [vmem:[%s177] sm:$0xf] %v1855
        %1888 = vst [vmem:[%s177 + $0x4] sm:$0xf] %v1856
        %1889 = vst [vmem:[%s177 + $0x8] sm:$0xf] %v1857
        %1890 = vst [vmem:[%s177 + $0xc] sm:$0xf] %v1858
        %1891 = vst [vmem:[%s177 + $0x10] sm:$0xf] %v1859
        %1892 = vst [vmem:[%s177 + $0x14] sm:$0xf] %v1860
        %1893 = vst [vmem:[%s177 + $0x18] sm:$0xf] %v1861
        %1894 = vst [vmem:[%s177 + $0x1c] sm:$0xf] %v1862
        %1895 = vst [vmem:[%s177 + $0x20] sm:$0xf] %v1863
        %1896 = vst [vmem:[%s177 + $0x24] sm:$0xf] %v1864
        %1897 = vst [vmem:[%s177 + $0x28] sm:$0xf] %v1865
        %1898 = vst [vmem:[%s177 + $0x2c] sm:$0xf] %v1866
        %1899 = vst [vmem:[%s177 + $0x30] sm:$0xf] %v1867
        %1900 = vst [vmem:[%s177 + $0x34] sm:$0xf] %v1868
        %1901 = vst [vmem:[%s177 + $0x38] sm:$0xf] %v1869
        %1902 = vst [vmem:[%s177 + $0x3c] sm:$0xf] %v1870
        %s1903 = sand.u32 %s107, 1
        %s1904 = scalar_lea.sflag [#allocation3], %s1903
        %s1905 = sand.u32 %s107, 1
        %s1906 = smul.addr %s1905, 64
        %s1907 = scalar_lea.vmem [#allocation2], %s1906
        // Predicated region
        $region33: #{tpu_custom_call.1} parent=31 // pred_check
          %p1908 = pneg %p117
        $region34: #{tpu_custom_call.1} parent=31 // pred_check_branch
          %1910 = sbr.rel (%p1908) target = $region36
        $region35: #{tpu_custom_call.1} parent=31 // pred_region
          %s1911 = smul.u32 8, %s22
          %s1913 = ssub.s32 1024, 1024
          %1914 = vsyncadd %s1904, %s1913
          %s1915 = smul.addr %s1911, 2
          %s1916 = smul.addr %s21, 32
          %s1917 = sadd.s32 %s1915, %s1916
          %s1918 = smul.addr %s1917, 64
          %s1919 = scalar_lea.hbm %s3, %s1918
          %s1920 = sshll.u32 %s1907, 4
          %s1921 = int_to_ptr.vmem [resolvable:$true] %s1920
          %1926 = dma.vmem_to_hbm [thread:$0]  %s1921, 1024, %s1919, %s1904, 64, 64, 4
        $region36: #{tpu_custom_call.1} parent=31 // pred_fallthru
          _
      $region32: #{tpu_custom_call.1} parent=5 // pred_fallthru
        _
      %p1927 = scmp.le.s32.totalorder 2, %s12
      // Predicated region
      $region37: #{tpu_custom_call.1} parent=5 // pred_check
        %p1928 = pneg %p1927
      $region38: #{tpu_custom_call.1} parent=5 // pred_check_branch
        %1930 = sbr.rel (%p1928) target = $region40
      $region39: #{tpu_custom_call.1} parent=5 // pred_region
        %s1931 = ssub.s32 %s12, 2
        // Predicated region
        $region41: #{tpu_custom_call.1} parent=39 // pred_check
          %p1932 = pneg %p123
        $region42: #{tpu_custom_call.1} parent=39 // pred_check_branch
          %1934 = sbr.rel (%p1932) target = $region44
        $region43: #{tpu_custom_call.1} parent=39 // pred_region
          %s1935 = sand.u32 %s108, 1
          %s1936 = scalar_lea.sflag [#allocation3], %s1935
          %s1937 = sand.u32 %s108, 1
          %s1938 = smul.addr %s1937, 64
          %s1939 = scalar_lea.vmem [#allocation2], %s1938
          %1940 = dma.done %s1936, 1024
        $region44: #{tpu_custom_call.1} parent=39 // pred_fallthru
          _
      $region40: #{tpu_custom_call.1} parent=5 // pred_fallthru
        _
    $region6: #{tpu_custom_call.1} parent=1 // loop_footer
      %s16 = sadd.s32 1, %s12
    $region7: #{tpu_custom_call.1} parent=1 // loop_footer_branch
      %11 = sbr.rel target = $region3
    $region8: #{tpu_custom_call.1} parent=1 // loop_exit
      _
    %1941 = vsyncpa [#allocation3], 1
    %s1942 = scalar_lea.sflag [#allocation3], 1
    %1943 = vsyncpa %s1942, 1

</llo_original>
